<compile_context>
chip_gen: v5e
topology: v5e:2x2
jax: 0.10.0
libtpu: 0.0.40
codegen_flags: <defaults>
</compile_context>

<pallas_src>
import functools
import math

import jax
import jax.numpy as jnp
from jax.experimental import pallas as pl
from jax.experimental.pallas import tpu as pltpu


MXU_DTYPE = jnp.bfloat16   # MXU operand dtype (f32 accumulation via preferred_element_type)
W_DTYPE = jnp.bfloat16     # weight storage dtype (set at init, no runtime casts)
ACT_DTYPE = jnp.bfloat16   # inter-kernel activation dtype (halves activation HBM traffic)


def _round_up(x, m):
    return ((x + m - 1) // m) * m


def _pick_vmem_limit():
    # Explicit scoped-VMEM budget (perf review): ~100 MiB on v5e/v6e, <=~54 MiB on v7x.
    try:
        cap = pltpu.get_tpu_info().vmem_capacity_bytes
        return int(min(cap * 0.85, 100 * 1024 * 1024))
    except Exception:
        return 48 * 1024 * 1024


_VMEM_LIMIT = _pick_vmem_limit()
# Whole-array VMEM spec: grid-constant operand, resident once, single-buffered.
_CONST = pl.BlockSpec(memory_space=pltpu.MemorySpace.VMEM)
_GRID_PARAMS = pltpu.CompilerParams(dimension_semantics=("parallel",),
                                    vmem_limit_bytes=_VMEM_LIMIT)
_NOGRID_PARAMS = pltpu.CompilerParams(vmem_limit_bytes=_VMEM_LIMIT)


# ----------------------------- in-kernel helpers -----------------------------

def _mxu(a, b):
    """a @ b with bf16 MXU operands, f32 accumulation (no-op cast if already bf16)."""
    return jnp.dot(a.astype(MXU_DTYPE), b.astype(MXU_DTYPE),
                   preferred_element_type=jnp.float32)


def _mxu_t(a, b):
    """a @ b.T (contract last dims) with bf16 operands, f32 accumulation."""
    return jax.lax.dot_general(a.astype(MXU_DTYPE), b.astype(MXU_DTYPE),
                               (((1,), (1,)), ((), ())),
                               preferred_element_type=jnp.float32)


def _layernorm(x, w, b, eps):
    mean = jnp.mean(x, axis=-1, keepdims=True)
    var = jnp.mean(jnp.square(x - mean), axis=-1, keepdims=True)
    return (x - mean) * jax.lax.rsqrt(var + eps) * w + b


# ------------------------------- Pallas kernels -------------------------------

def _embed_kernel(tok_ref, w_ref, pos_ref, lnw_ref, lnb_ref, o_ref, *, eps):
    # tokens (1, Lpad, Kpad) bf16: row 0 is a one-hot selecting the class-embedding row
    # of the extended (padded-K) conv weight, rows 1..GG are the flattened patches ->
    # one matmul yields [cls; patches @ conv_w]. Then + pos embedding, ln_pre. All fused.
    x = _mxu(tok_ref[0], w_ref[...]) + pos_ref[...]
    o_ref[0] = _layernorm(x, lnw_ref[...], lnb_ref[...], eps).astype(o_ref.dtype)


def _block_kernel(x_ref, mask_ref, ln1w_ref, ln1b_ref, wqkv_ref, bqkv_ref,
                  wo_ref, bo_ref, ln2w_ref, ln2b_ref, wfc_ref, bfc_ref,
                  wproj_ref, bproj_ref, o_ref, *, heads, width, eps):
    """One full residual-attention block (attention + MLP) fused in a single kernel."""
    dh = width // heads
    x = x_ref[0].astype(jnp.float32)                       # (L, W) f32 working precision

    # ---- attention: ln1 -> fused QKV GEMM -> per-head softmax attn -> out_proj -> +res
    y = _layernorm(x, ln1w_ref[...], ln1b_ref[...], eps)
    qkv = _mxu(y, wqkv_ref[...]) + bqkv_ref[...]           # (L, 3W); scale folded into Q
    mask = mask_ref[...]                                   # (1, L): 0 valid / -1e30 pad keys
    # TODO(synk): at real shapes (heads=16, L=257) switch to lax.fori_loop to bound the
    # live ranges of the (L, L) score/prob intermediates.
    head_outs = []
    for h in range(heads):                                 # static unroll (tiny head count)
        q = qkv[:, h * dh:(h + 1) * dh]
        k = qkv[:, width + h * dh: width + (h + 1) * dh]
        v = qkv[:, 2 * width + h * dh: 2 * width + (h + 1) * dh]
        s = _mxu_t(q, k) + mask                            # (L, L) f32, padded keys masked
        s = s - jnp.max(s, axis=-1, keepdims=True)
        p = jnp.exp(s)
        p = p * pl.reciprocal(jnp.sum(p, axis=-1, keepdims=True), approx=True)
        head_outs.append(_mxu(p, v))                       # (L, dh)
    attn = jnp.concatenate(head_outs, axis=-1)             # (L, W) concat heads
    x = x + _mxu(attn, wo_ref[...]) + bo_ref[...]          # single full-width out_proj

    # ---- MLP: ln2 -> fc -> QuickGELU -> proj -> +residual
    y = _layernorm(x, ln2w_ref[...], ln2b_ref[...], eps)
    h = _mxu(y, wfc_ref[...]) + bfc_ref[...]
    h = h * jax.nn.sigmoid(1.702 * h)                      # QuickGELU, f32 on VPU/EUP
    x = x + _mxu(h, wproj_ref[...]) + bproj_ref[...]

    o_ref[0] = x.astype(o_ref.dtype)


def _head_kernel(cls_ref, lnw_ref, lnb_ref, vproj_ref, hw_ref, hb_ref, o_ref, *, eps):
    # Fused tail: ln_post(CLS) -> visual projection -> classification head.
    # Output padded to 128 lanes (lane-dense store); wrapper slices to n_class.
    y = _layernorm(cls_ref[...].astype(jnp.float32), lnw_ref[...], lnb_ref[...], eps)
    feat = _mxu(y, vproj_ref[...])
    o_ref[...] = _mxu(feat, hw_ref[...]) + hb_ref[...]


# ------------------------------ Pallas wrappers --------------------------------

def _embed_call(tokens, p):
    B, L, K = tokens.shape
    Wd = p["width"]
    kernel = functools.partial(_embed_kernel, eps=p["eps"])
    row_out = pl.BlockSpec((1, L, Wd), lambda b: (b, 0, 0))
    return pl.pallas_call(
        kernel,
        out_shape=jax.ShapeDtypeStruct((B, L, Wd), ACT_DTYPE),
        grid=(B,),
        in_specs=[pl.BlockSpec((1, L, K), lambda b: (b, 0, 0))] + [_CONST] * 4,
        out_specs=row_out,
        compiler_params=_GRID_PARAMS,
    )(tokens, p["embed_w"], p["pos_embedding"], p["ln_pre_w"], p["ln_pre_b"])


def _block_call(x, blk, p):
    B, L, Wd = x.shape
    kernel = functools.partial(_block_kernel, heads=p["heads"], width=Wd, eps=p["eps"])
    row = pl.BlockSpec((1, L, Wd), lambda b: (b, 0, 0))
    return pl.pallas_call(
        kernel,
        out_shape=jax.ShapeDtypeStruct((B, L, Wd), ACT_DTYPE),
        grid=(B,),
        in_specs=[row] + [_CONST] * 13,
        out_specs=row,
        compiler_params=_GRID_PARAMS,
    )(x, p["attn_mask"],
      blk["ln1_w"], blk["ln1_b"], blk["wqkv"], blk["bqkv"], blk["wo"], blk["bo"],
      blk["ln2_w"], blk["ln2_b"], blk["fc_w"], blk["fc_b"], blk["proj_w"], blk["proj_b"])


def _head_call(cls_tok, p):
    B, _ = cls_tok.shape
    NP = p["head_w"].shape[1]
    kernel = functools.partial(_head_kernel, eps=p["eps"])
    return pl.pallas_call(
        kernel,
        out_shape=jax.ShapeDtypeStruct((B, NP), jnp.float32),
        in_specs=[_CONST] * 6,
        out_specs=_CONST,
        compiler_params=_NOGRID_PARAMS,
    )(cls_tok, p["ln_post_w"], p["ln_post_b"], p["visual_proj"], p["head_w"], p["head_b"])


# ------------------------------ params (synthetic) ------------------------------

def init_params(key, *, image_resolution=16, patch_size=4, width=32, layers=2,
                heads=2, embed_dim=16, n_class=10):
    # TODO(synk): real use would load the pretrained CLIP ViT-L/14 checkpoint and apply
    # these same one-time layout transforms (transpose, scale folding, bf16 cast, padding).
    grid = image_resolution // patch_size
    seq_len = grid * grid + 1
    seq_pad = _round_up(seq_len, 8)          # token axis padded to sublane multiple
    dh = width // heads
    cpp = 3 * patch_size * patch_size
    k_pad = _round_up(cpp + 1, 128)          # embed contraction dim padded to lane multiple
    n_class_pad = _round_up(n_class, 128)    # lane-dense head output
    emb_scale = width ** -0.5
    scale = 1.0 / math.sqrt(dh)

    def nrm(k, shape, std=0.02):
        return (std * jax.random.normal(k, shape)).astype(jnp.float32)

    keys = iter(jax.random.split(key, 6 + 8 * layers))

    conv1_w = nrm(next(keys), (width, 3, patch_size, patch_size))           # PyTorch layout
    class_embedding = (emb_scale * jax.random.normal(next(keys), (width,))).astype(jnp.float32)
    pos_embedding = (emb_scale * jax.random.normal(next(keys), (seq_len, width))).astype(jnp.float32)
    visual_proj = (emb_scale * jax.random.normal(next(keys), (width, embed_dim))).astype(jnp.float32)
    head_w_pt = nrm(next(keys), (n_class, embed_dim))                       # PyTorch (out, in)
    head_b_pt = nrm(next(keys), (n_class,), std=0.01)

    # stride==kernel conv + class token folded into a single (k_pad, W) matmul weight.
    embed_w = jnp.zeros((k_pad, width), jnp.float32)
    embed_w = embed_w.at[:cpp].set(conv1_w.reshape(width, cpp).T)
    embed_w = embed_w.at[cpp].set(class_embedding)

    pos_pad = jnp.zeros((seq_pad, width), jnp.float32).at[:seq_len].set(pos_embedding)
    attn_mask = jnp.where(jnp.arange(seq_pad)[None, :] < seq_len,
                          0.0, -1e30).astype(jnp.float32)

    head_w = jnp.zeros((embed_dim, n_class_pad), jnp.float32).at[:, :n_class].set(head_w_pt.T)
    head_b = jnp.zeros((1, n_class_pad), jnp.float32).at[0, :n_class].set(head_b_pt)

    p = {
        "patch_size": patch_size, "width": width, "heads": heads,
        "n_class": n_class, "eps": 1e-5,
        "seq_len": seq_len, "seq_pad": seq_pad, "k_pad": k_pad,
        "embed_w": embed_w.astype(W_DTYPE),
        "pos_embedding": pos_pad,
        "attn_mask": attn_mask,
        "ln_pre_w": jnp.ones((1, width), jnp.float32),
        "ln_pre_b": jnp.zeros((1, width), jnp.float32),
        "ln_post_w": jnp.ones((1, width), jnp.float32),
        "ln_post_b": jnp.zeros((1, width), jnp.float32),
        "visual_proj": visual_proj.astype(W_DTYPE),
        "head_w": head_w.astype(W_DTYPE), "head_b": head_b,
        "blocks": [],
    }

    for _ in range(layers):
        in_proj_w = nrm(next(keys), (3 * width, width))     # PyTorch (3W, W)
        in_proj_b = nrm(next(keys), (3 * width,), std=0.01)
        out_proj_w = nrm(next(keys), (width, width))        # PyTorch (W, W)
        out_proj_b = nrm(next(keys), (width,), std=0.01)
        fc_w_pt = nrm(next(keys), (4 * width, width))
        fc_b_pt = nrm(next(keys), (4 * width,), std=0.01)
        proj_w_pt = nrm(next(keys), (width, 4 * width))
        proj_b_pt = nrm(next(keys), (width,), std=0.01)

        # fused (W, 3W) QKV weight; 1/sqrt(dh) folded into the Q slice (weight AND bias)
        wqkv = in_proj_w.T
        wqkv = wqkv.at[:, :width].multiply(scale)
        bqkv = in_proj_b[None, :]
        bqkv = bqkv.at[:, :width].multiply(scale)

        blk = {
            "ln1_w": jnp.ones((1, width), jnp.float32),
            "ln1_b": jnp.zeros((1, width), jnp.float32),
            "wqkv": wqkv.astype(W_DTYPE), "bqkv": bqkv.astype(jnp.float32),
            "wo": out_proj_w.T.astype(W_DTYPE), "bo": out_proj_b[None, :].astype(jnp.float32),
            "ln2_w": jnp.ones((1, width), jnp.float32),
            "ln2_b": jnp.zeros((1, width), jnp.float32),
            "fc_w": fc_w_pt.T.astype(W_DTYPE), "fc_b": fc_b_pt[None, :].astype(jnp.float32),
            "proj_w": proj_w_pt.T.astype(W_DTYPE), "proj_b": proj_b_pt[None, :].astype(jnp.float32),
        }
        p["blocks"].append(blk)
    return p


# --------------------------------- forward --------------------------------------

def clip_image_encoder_forward(params, image):
    """image: (B, 3, H, W) NCHW float. Returns (B, n_class) logits."""
    image = image.astype(jnp.float32)
    B, C, H, _ = image.shape
    P = params["patch_size"]
    G = H // P
    GG = G * G
    CPP = C * P * P
    Lpad = params["seq_pad"]
    Kpad = params["k_pad"]

    # patchify (XLA glue): the stride==kernel conv becomes one matmul inside the kernel.
    patches = image.reshape(B, C, G, P, G, P).transpose(0, 2, 4, 1, 3, 5).reshape(B, GG, CPP)
    # token matrix padded to (Lpad, Kpad): row 0 is a one-hot selecting class_embedding,
    # rows 1..GG are the patches, remaining rows/cols are zero (keys are masked in attn).
    tokens = jnp.zeros((B, Lpad, Kpad), jnp.float32)
    tokens = tokens.at[:, 0, CPP].set(1.0)
    tokens = tokens.at[:, 1:1 + GG, :CPP].set(patches)
    tokens = tokens.astype(ACT_DTYPE)                 # bf16 MXU operand (matches CLIP fp16 spirit)

    # conv1 + class token + positional embedding + ln_pre: one fused kernel.
    x = _embed_call(tokens, params)                   # (B, Lpad, W) bf16

    # transformer: ONE fused kernel (attn + MLP) per residual attention block.
    for blk in params["blocks"]:
        x = _block_call(x, blk, params)

    # ln_post(CLS) + visual projection + classification head: one fused tail kernel.
    logits_pad = _head_call(x[:, 0, :], params)       # (B, 128) lane-dense f32
    return logits_pad[:, : params["n_class"]]


# ----------------------------------- main ----------------------------------------

if __name__ == "__main__":
    key = jax.random.PRNGKey(0)
    k_img, k_par = jax.random.split(key)

    B, C, R = 2, 3, 16            # small synthetic ViT: 16x16 image, 4x4 patches
    n_class = 10
    image = jax.random.normal(k_img, (B, C, R, R), dtype=jnp.float32)

    params = init_params(k_par, image_resolution=R, patch_size=4, width=32,
                         layers=2, heads=2, embed_dim=16, n_class=n_class)

    fwd = jax.jit(functools.partial(clip_image_encoder_forward, params))
    logits = jax.block_until_ready(fwd(image))

    assert logits.shape == (B, n_class)
    assert bool(jnp.all(jnp.isfinite(logits)))
    print("KERNEL_OK")
</pallas_src>

<mosaic_0001>
module attributes {stable_mosaic.version = 11 : i64} {
  func.func @_embed_kernel(%arg0: i32, %arg1: memref<1x24x128xbf16, #tpu.memory_space<vmem>>, %arg2: memref<128x32xbf16, #tpu.memory_space<vmem>>, %arg3: memref<24x32xf32, #tpu.memory_space<vmem>>, %arg4: memref<1x32xf32, #tpu.memory_space<vmem>>, %arg5: memref<1x32xf32, #tpu.memory_space<vmem>>, %arg6: memref<1x24x32xbf16, #tpu.memory_space<vmem>>) attributes {dimension_semantics = [#tpu.dimension_semantics<parallel>], iteration_bounds = array<i64: 2>, scalar_prefetch = 0 : i64, scratch_operands = 0 : i64, tpu.core_type = #tpu.core_type<tc>, window_params = [{transform_indices = @transform_0, window_bounds = array<i64: 1, 24, 128>}, {pipeline_mode = #tpu.pipeline_mode<synchronous>, transform_indices = @transform_1, window_bounds = array<i64: 128, 32>}, {pipeline_mode = #tpu.pipeline_mode<synchronous>, transform_indices = @transform_2, window_bounds = array<i64: 24, 32>}, {pipeline_mode = #tpu.pipeline_mode<synchronous>, transform_indices = @transform_3, window_bounds = array<i64: 1, 32>}, {pipeline_mode = #tpu.pipeline_mode<synchronous>, transform_indices = @transform_4, window_bounds = array<i64: 1, 32>}, {transform_indices = @transform_5, window_bounds = array<i64: 1, 24, 32>}]} {
    %c0 = arith.constant 0 : index
    %c0_0 = arith.constant 0 : index
    %c0_1 = arith.constant 0 : index
    %0 = vector.load %arg1[%c0, %c0_0, %c0_1] : memref<1x24x128xbf16, #tpu.memory_space<vmem>>, vector<1x24x128xbf16>
    %1 = vector.shape_cast %0 : vector<1x24x128xbf16> to vector<24x128xbf16>
    %c0_2 = arith.constant 0 : index
    %c0_3 = arith.constant 0 : index
    %2 = vector.load %arg2[%c0_2, %c0_3] : memref<128x32xbf16, #tpu.memory_space<vmem>>, vector<128x32xbf16>
    %cst = arith.constant dense<0.000000e+00> : vector<24x32xf32>
    %3 = tpu.matmul %1, %2, %cst {dimension_numbers = #tpu.dot_dimension_numbers<[1], [0], [0], [1], [0, 0, 1, 1], [], []>} : vector<24x128xbf16>, vector<128x32xbf16>, vector<24x32xf32> -> vector<24x32xf32>
    %c0_4 = arith.constant 0 : index
    %c0_5 = arith.constant 0 : index
    %4 = vector.load %arg3[%c0_4, %c0_5] : memref<24x32xf32, #tpu.memory_space<vmem>>, vector<24x32xf32>
    %5 = arith.addf %3, %4 : vector<24x32xf32>
    %c0_6 = arith.constant 0 : index
    %c0_7 = arith.constant 0 : index
    %6 = vector.load %arg4[%c0_6, %c0_7] : memref<1x32xf32, #tpu.memory_space<vmem>>, vector<1x32xf32>
    %c0_8 = arith.constant 0 : index
    %c0_9 = arith.constant 0 : index
    %7 = vector.load %arg5[%c0_8, %c0_9] : memref<1x32xf32, #tpu.memory_space<vmem>>, vector<1x32xf32>
    %cst_10 = arith.constant dense<0.000000e+00> : vector<24xf32>
    %8 = vector.multi_reduction <add>, %5, %cst_10 [1] : vector<24x32xf32> to vector<24xf32>
    %9 = vector.shape_cast %8 : vector<24xf32> to vector<24x1xf32>
    %cst_11 = arith.constant 3.200000e+01 : f32
    %10 = vector.broadcast %cst_11 : f32 to vector<24x1xf32>
    %11 = arith.divf %9, %10 : vector<24x1xf32>
    %12 = vector.broadcast %11 : vector<24x1xf32> to vector<24x32xf32>
    %13 = arith.subf %5, %12 : vector<24x32xf32>
    %14 = arith.mulf %13, %13 : vector<24x32xf32>
    %cst_12 = arith.constant dense<0.000000e+00> : vector<24xf32>
    %15 = vector.multi_reduction <add>, %14, %cst_12 [1] : vector<24x32xf32> to vector<24xf32>
    %16 = vector.shape_cast %15 : vector<24xf32> to vector<24x1xf32>
    %cst_13 = arith.constant 3.200000e+01 : f32
    %17 = vector.broadcast %cst_13 : f32 to vector<24x1xf32>
    %18 = arith.divf %16, %17 : vector<24x1xf32>
    %19 = vector.broadcast %11 : vector<24x1xf32> to vector<24x32xf32>
    %20 = arith.subf %5, %19 : vector<24x32xf32>
    %cst_14 = arith.constant 9.99999974E-6 : f32
    %21 = vector.broadcast %cst_14 : f32 to vector<24x1xf32>
    %22 = arith.addf %18, %21 : vector<24x1xf32>
    %23 = math.rsqrt %22 : vector<24x1xf32>
    %24 = vector.broadcast %23 : vector<24x1xf32> to vector<24x32xf32>
    %25 = arith.mulf %20, %24 : vector<24x32xf32>
    %26 = vector.broadcast %6 : vector<1x32xf32> to vector<24x32xf32>
    %27 = arith.mulf %25, %26 : vector<24x32xf32>
    %28 = vector.broadcast %7 : vector<1x32xf32> to vector<24x32xf32>
    %29 = arith.addf %27, %28 : vector<24x32xf32>
    %30 = arith.truncf %29 : vector<24x32xf32> to vector<24x32xbf16>
    %c0_15 = arith.constant 0 : index
    %c0_16 = arith.constant 0 : index
    %c0_17 = arith.constant 0 : index
    %31 = vector.load %arg6[%c0_15, %c0_16, %c0_17] : memref<1x24x32xbf16, #tpu.memory_space<vmem>>, vector<1x24x32xbf16>
    %32 = vector.shape_cast %31 : vector<1x24x32xbf16> to vector<24x32xbf16>
    %33 = vector.shape_cast %30 : vector<24x32xbf16> to vector<1x24x32xbf16>
    tpu.vector_store %arg6[%c0_15, %c0_16, %c0_17], %33 {strides = array<i32>} : memref<1x24x32xbf16, #tpu.memory_space<vmem>>, vector<1x24x32xbf16>,
    return
  }
  func.func @transform_0(%arg0: i32) -> (i32, i32, i32) {
    %c0_i32 = arith.constant 0 : i32
    %c0_i32_0 = arith.constant 0 : i32
    %c0_i32_1 = arith.constant 0 : i32
    return %arg0, %c0_i32, %c0_i32_0 : i32, i32, i32
  }
  func.func @transform_1(%arg0: i32) -> (i32, i32) {
    %c0_i32 = arith.constant 0 : i32
    %c0_i32_0 = arith.constant 0 : i32
    %c0_i32_1 = arith.constant 0 : i32
    return %c0_i32, %c0_i32_0 : i32, i32
  }
  func.func @transform_2(%arg0: i32) -> (i32, i32) {
    %c0_i32 = arith.constant 0 : i32
    %c0_i32_0 = arith.constant 0 : i32
    %c0_i32_1 = arith.constant 0 : i32
    return %c0_i32, %c0_i32_0 : i32, i32
  }
  func.func @transform_3(%arg0: i32) -> (i32, i32) {
    %c0_i32 = arith.constant 0 : i32
    %c0_i32_0 = arith.constant 0 : i32
    %c0_i32_1 = arith.constant 0 : i32
    return %c0_i32, %c0_i32_0 : i32, i32
  }
  func.func @transform_4(%arg0: i32) -> (i32, i32) {
    %c0_i32 = arith.constant 0 : i32
    %c0_i32_0 = arith.constant 0 : i32
    %c0_i32_1 = arith.constant 0 : i32
    return %c0_i32, %c0_i32_0 : i32, i32
  }
  func.func @transform_5(%arg0: i32) -> (i32, i32, i32) {
    %c0_i32 = arith.constant 0 : i32
    %c0_i32_0 = arith.constant 0 : i32
    %c0_i32_1 = arith.constant 0 : i32
    return %arg0, %c0_i32, %c0_i32_0 : i32, i32, i32
  }
}

module attributes {stable_mosaic.version = 11 : i64} {
  func.func @_block_kernel(%arg0: i32, %arg1: memref<1x24x32xbf16, #tpu.memory_space<vmem>>, %arg2: memref<1x24xf32, #tpu.memory_space<vmem>>, %arg3: memref<1x32xf32, #tpu.memory_space<vmem>>, %arg4: memref<1x32xf32, #tpu.memory_space<vmem>>, %arg5: memref<32x96xbf16, #tpu.memory_space<vmem>>, %arg6: memref<1x96xf32, #tpu.memory_space<vmem>>, %arg7: memref<32x32xbf16, #tpu.memory_space<vmem>>, %arg8: memref<1x32xf32, #tpu.memory_space<vmem>>, %arg9: memref<1x32xf32, #tpu.memory_space<vmem>>, %arg10: memref<1x32xf32, #tpu.memory_space<vmem>>, %arg11: memref<32x128xbf16, #tpu.memory_space<vmem>>, %arg12: memref<1x128xf32, #tpu.memory_space<vmem>>, %arg13: memref<128x32xbf16, #tpu.memory_space<vmem>>, %arg14: memref<1x32xf32, #tpu.memory_space<vmem>>, %arg15: memref<1x24x32xbf16, #tpu.memory_space<vmem>>) attributes {dimension_semantics = [#tpu.dimension_semantics<parallel>], iteration_bounds = array<i64: 2>, scalar_prefetch = 0 : i64, scratch_operands = 0 : i64, tpu.core_type = #tpu.core_type<tc>, window_params = [{transform_indices = @transform_0, window_bounds = array<i64: 1, 24, 32>}, {pipeline_mode = #tpu.pipeline_mode<synchronous>, transform_indices = @transform_1, window_bounds = array<i64: 1, 24>}, {pipeline_mode = #tpu.pipeline_mode<synchronous>, transform_indices = @transform_2, window_bounds = array<i64: 1, 32>}, {pipeline_mode = #tpu.pipeline_mode<synchronous>, transform_indices = @transform_3, window_bounds = array<i64: 1, 32>}, {pipeline_mode = #tpu.pipeline_mode<synchronous>, transform_indices = @transform_4, window_bounds = array<i64: 32, 96>}, {pipeline_mode = #tpu.pipeline_mode<synchronous>, transform_indices = @transform_5, window_bounds = array<i64: 1, 96>}, {pipeline_mode = #tpu.pipeline_mode<synchronous>, transform_indices = @transform_6, window_bounds = array<i64: 32, 32>}, {pipeline_mode = #tpu.pipeline_mode<synchronous>, transform_indices = @transform_7, window_bounds = array<i64: 1, 32>}, {pipeline_mode = #tpu.pipeline_mode<synchronous>, transform_indices = @transform_8, window_bounds = array<i64: 1, 32>}, {pipeline_mode = #tpu.pipeline_mode<synchronous>, transform_indices = @transform_9, window_bounds = array<i64: 1, 32>}, {pipeline_mode = #tpu.pipeline_mode<synchronous>, transform_indices = @transform_10, window_bounds = array<i64: 32, 128>}, {pipeline_mode = #tpu.pipeline_mode<synchronous>, transform_indices = @transform_11, window_bounds = array<i64: 1, 128>}, {pipeline_mode = #tpu.pipeline_mode<synchronous>, transform_indices = @transform_12, window_bounds = array<i64: 128, 32>}, {pipeline_mode = #tpu.pipeline_mode<synchronous>, transform_indices = @transform_13, window_bounds = array<i64: 1, 32>}, {transform_indices = @transform_14, window_bounds = array<i64: 1, 24, 32>}]} {
    %c0 = arith.constant 0 : index
    %c0_0 = arith.constant 0 : index
    %c0_1 = arith.constant 0 : index
    %0 = vector.load %arg1[%c0, %c0_0, %c0_1] : memref<1x24x32xbf16, #tpu.memory_space<vmem>>, vector<1x24x32xbf16>
    %1 = vector.shape_cast %0 : vector<1x24x32xbf16> to vector<24x32xbf16>
    %2 = arith.extf %1 : vector<24x32xbf16> to vector<24x32xf32>
    %c0_2 = arith.constant 0 : index
    %c0_3 = arith.constant 0 : index
    %3 = vector.load %arg3[%c0_2, %c0_3] : memref<1x32xf32, #tpu.memory_space<vmem>>, vector<1x32xf32>
    %c0_4 = arith.constant 0 : index
    %c0_5 = arith.constant 0 : index
    %4 = vector.load %arg4[%c0_4, %c0_5] : memref<1x32xf32, #tpu.memory_space<vmem>>, vector<1x32xf32>
    %cst = arith.constant dense<0.000000e+00> : vector<24xf32>
    %5 = vector.multi_reduction <add>, %2, %cst [1] : vector<24x32xf32> to vector<24xf32>
    %6 = vector.shape_cast %5 : vector<24xf32> to vector<24x1xf32>
    %cst_6 = arith.constant 3.200000e+01 : f32
    %7 = vector.broadcast %cst_6 : f32 to vector<24x1xf32>
    %8 = arith.divf %6, %7 : vector<24x1xf32>
    %9 = vector.broadcast %8 : vector<24x1xf32> to vector<24x32xf32>
    %10 = arith.subf %2, %9 : vector<24x32xf32>
    %11 = arith.mulf %10, %10 : vector<24x32xf32>
    %cst_7 = arith.constant dense<0.000000e+00> : vector<24xf32>
    %12 = vector.multi_reduction <add>, %11, %cst_7 [1] : vector<24x32xf32> to vector<24xf32>
    %13 = vector.shape_cast %12 : vector<24xf32> to vector<24x1xf32>
    %cst_8 = arith.constant 3.200000e+01 : f32
    %14 = vector.broadcast %cst_8 : f32 to vector<24x1xf32>
    %15 = arith.divf %13, %14 : vector<24x1xf32>
    %16 = vector.broadcast %8 : vector<24x1xf32> to vector<24x32xf32>
    %17 = arith.subf %2, %16 : vector<24x32xf32>
    %cst_9 = arith.constant 9.99999974E-6 : f32
    %18 = vector.broadcast %cst_9 : f32 to vector<24x1xf32>
    %19 = arith.addf %15, %18 : vector<24x1xf32>
    %20 = math.rsqrt %19 : vector<24x1xf32>
    %21 = vector.broadcast %20 : vector<24x1xf32> to vector<24x32xf32>
    %22 = arith.mulf %17, %21 : vector<24x32xf32>
    %23 = vector.broadcast %3 : vector<1x32xf32> to vector<24x32xf32>
    %24 = arith.mulf %22, %23 : vector<24x32xf32>
    %25 = vector.broadcast %4 : vector<1x32xf32> to vector<24x32xf32>
    %26 = arith.addf %24, %25 : vector<24x32xf32>
    %c0_10 = arith.constant 0 : index
    %c0_11 = arith.constant 0 : index
    %27 = vector.load %arg5[%c0_10, %c0_11] : memref<32x96xbf16, #tpu.memory_space<vmem>>, vector<32x96xbf16>
    %28 = arith.truncf %26 : vector<24x32xf32> to vector<24x32xbf16>
    %cst_12 = arith.constant dense<0.000000e+00> : vector<24x96xf32>
    %29 = tpu.matmul %28, %27, %cst_12 {dimension_numbers = #tpu.dot_dimension_numbers<[1], [0], [0], [1], [0, 0, 1, 1], [], []>} : vector<24x32xbf16>, vector<32x96xbf16>, vector<24x96xf32> -> vector<24x96xf32>
    %c0_13 = arith.constant 0 : index
    %c0_14 = arith.constant 0 : index
    %30 = vector.load %arg6[%c0_13, %c0_14] : memref<1x96xf32, #tpu.memory_space<vmem>>, vector<1x96xf32>
    %31 = vector.broadcast %30 : vector<1x96xf32> to vector<24x96xf32>
    %32 = arith.addf %29, %31 : vector<24x96xf32>
    %c0_15 = arith.constant 0 : index
    %c0_16 = arith.constant 0 : index
    %33 = vector.load %arg2[%c0_15, %c0_16] : memref<1x24xf32, #tpu.memory_space<vmem>>, vector<1x24xf32>
    %34 = vector.extract_strided_slice %32 {offsets = [0, 0], sizes = [24, 16], strides = [1, 1]} : vector<24x96xf32> to vector<24x16xf32>
    %35 = vector.extract_strided_slice %32 {offsets = [0, 32], sizes = [24, 16], strides = [1, 1]} : vector<24x96xf32> to vector<24x16xf32>
    %36 = vector.extract_strided_slice %32 {offsets = [0, 64], sizes = [24, 16], strides = [1, 1]} : vector<24x96xf32> to vector<24x16xf32>
    %37 = arith.truncf %34 : vector<24x16xf32> to vector<24x16xbf16>
    %38 = arith.truncf %35 : vector<24x16xf32> to vector<24x16xbf16>
    %cst_17 = arith.constant dense<0.000000e+00> : vector<24x24xf32>
    %39 = tpu.matmul %37, %38, %cst_17 {dimension_numbers = #tpu.dot_dimension_numbers<[1], [1], [0], [0], [0, 0, 1, 0], [], []>} : vector<24x16xbf16>, vector<24x16xbf16>, vector<24x24xf32> -> vector<24x24xf32>
    %40 = vector.broadcast %33 : vector<1x24xf32> to vector<24x24xf32>
    %41 = arith.addf %39, %40 : vector<24x24xf32>
    %cst_18 = arith.constant dense<0xFF800000> : vector<24xf32>
    %42 = vector.multi_reduction <maximumf>, %41, %cst_18 [1] : vector<24x24xf32> to vector<24xf32>
    %43 = vector.shape_cast %42 : vector<24xf32> to vector<24x1xf32>
    %44 = vector.broadcast %43 : vector<24x1xf32> to vector<24x24xf32>
    %45 = arith.subf %41, %44 : vector<24x24xf32>
    %46 = math.exp %45 : vector<24x24xf32>
    %cst_19 = arith.constant dense<0.000000e+00> : vector<24xf32>
    %47 = vector.multi_reduction <add>, %46, %cst_19 [1] : vector<24x24xf32> to vector<24xf32>
    %48 = vector.shape_cast %47 : vector<24xf32> to vector<24x1xf32>
    %49 = tpu.reciprocal %48 {approx = true} : vector<24x1xf32> -> vector<24x1xf32>
    %50 = vector.broadcast %49 : vector<24x1xf32> to vector<24x24xf32>
    %51 = arith.mulf %46, %50 : vector<24x24xf32>
    %52 = arith.truncf %51 : vector<24x24xf32> to vector<24x24xbf16>
    %53 = arith.truncf %36 : vector<24x16xf32> to vector<24x16xbf16>
    %cst_20 = arith.constant dense<0.000000e+00> : vector<24x16xf32>
    %54 = tpu.matmul %52, %53, %cst_20 {dimension_numbers = #tpu.dot_dimension_numbers<[1], [0], [0], [1], [0, 0, 1, 1], [], []>} : vector<24x24xbf16>, vector<24x16xbf16>, vector<24x16xf32> -> vector<24x16xf32>
    %55 = vector.extract_strided_slice %32 {offsets = [0, 16], sizes = [24, 16], strides = [1, 1]} : vector<24x96xf32> to vector<24x16xf32>
    %56 = vector.extract_strided_slice %32 {offsets = [0, 48], sizes = [24, 16], strides = [1, 1]} : vector<24x96xf32> to vector<24x16xf32>
    %57 = vector.extract_strided_slice %32 {offsets = [0, 80], sizes = [24, 16], strides = [1, 1]} : vector<24x96xf32> to vector<24x16xf32>
    %58 = arith.truncf %55 : vector<24x16xf32> to vector<24x16xbf16>
    %59 = arith.truncf %56 : vector<24x16xf32> to vector<24x16xbf16>
    %cst_21 = arith.constant dense<0.000000e+00> : vector<24x24xf32>
    %60 = tpu.matmul %58, %59, %cst_21 {dimension_numbers = #tpu.dot_dimension_numbers<[1], [1], [0], [0], [0, 0, 1, 0], [], []>} : vector<24x16xbf16>, vector<24x16xbf16>, vector<24x24xf32> -> vector<24x24xf32>
    %61 = vector.broadcast %33 : vector<1x24xf32> to vector<24x24xf32>
    %62 = arith.addf %60, %61 : vector<24x24xf32>
    %cst_22 = arith.constant dense<0xFF800000> : vector<24xf32>
    %63 = vector.multi_reduction <maximumf>, %62, %cst_22 [1] : vector<24x24xf32> to vector<24xf32>
    %64 = vector.shape_cast %63 : vector<24xf32> to vector<24x1xf32>
    %65 = vector.broadcast %64 : vector<24x1xf32> to vector<24x24xf32>
    %66 = arith.subf %62, %65 : vector<24x24xf32>
    %67 = math.exp %66 : vector<24x24xf32>
    %cst_23 = arith.constant dense<0.000000e+00> : vector<24xf32>
    %68 = vector.multi_reduction <add>, %67, %cst_23 [1] : vector<24x24xf32> to vector<24xf32>
    %69 = vector.shape_cast %68 : vector<24xf32> to vector<24x1xf32>
    %70 = tpu.reciprocal %69 {approx = true} : vector<24x1xf32> -> vector<24x1xf32>
    %71 = vector.broadcast %70 : vector<24x1xf32> to vector<24x24xf32>
    %72 = arith.mulf %67, %71 : vector<24x24xf32>
    %73 = arith.truncf %72 : vector<24x24xf32> to vector<24x24xbf16>
    %74 = arith.truncf %57 : vector<24x16xf32> to vector<24x16xbf16>
    %cst_24 = arith.constant dense<0.000000e+00> : vector<24x16xf32>
    %75 = tpu.matmul %73, %74, %cst_24 {dimension_numbers = #tpu.dot_dimension_numbers<[1], [0], [0], [1], [0, 0, 1, 1], [], []>} : vector<24x24xbf16>, vector<24x16xbf16>, vector<24x16xf32> -> vector<24x16xf32>
    %76 = tpu.concatenate %54, %75 in 1 : vector<24x16xf32>, vector<24x16xf32> -> vector<24x32xf32>
    %c0_25 = arith.constant 0 : index
    %c0_26 = arith.constant 0 : index
    %77 = vector.load %arg7[%c0_25, %c0_26] : memref<32x32xbf16, #tpu.memory_space<vmem>>, vector<32x32xbf16>
    %78 = arith.truncf %76 : vector<24x32xf32> to vector<24x32xbf16>
    %cst_27 = arith.constant dense<0.000000e+00> : vector<24x32xf32>
    %79 = tpu.matmul %78, %77, %cst_27 {dimension_numbers = #tpu.dot_dimension_numbers<[1], [0], [0], [1], [0, 0, 1, 1], [], []>} : vector<24x32xbf16>, vector<32x32xbf16>, vector<24x32xf32> -> vector<24x32xf32>
    %80 = arith.addf %2, %79 : vector<24x32xf32>
    %c0_28 = arith.constant 0 : index
    %c0_29 = arith.constant 0 : index
    %81 = vector.load %arg8[%c0_28, %c0_29] : memref<1x32xf32, #tpu.memory_space<vmem>>, vector<1x32xf32>
    %82 = vector.broadcast %81 : vector<1x32xf32> to vector<24x32xf32>
    %83 = arith.addf %80, %82 : vector<24x32xf32>
    %c0_30 = arith.constant 0 : index
    %c0_31 = arith.constant 0 : index
    %84 = vector.load %arg9[%c0_30, %c0_31] : memref<1x32xf32, #tpu.memory_space<vmem>>, vector<1x32xf32>
    %c0_32 = arith.constant 0 : index
    %c0_33 = arith.constant 0 : index
    %85 = vector.load %arg10[%c0_32, %c0_33] : memref<1x32xf32, #tpu.memory_space<vmem>>, vector<1x32xf32>
    %cst_34 = arith.constant dense<0.000000e+00> : vector<24xf32>
    %86 = vector.multi_reduction <add>, %83, %cst_34 [1] : vector<24x32xf32> to vector<24xf32>
    %87 = vector.shape_cast %86 : vector<24xf32> to vector<24x1xf32>
    %cst_35 = arith.constant 3.200000e+01 : f32
    %88 = vector.broadcast %cst_35 : f32 to vector<24x1xf32>
    %89 = arith.divf %87, %88 : vector<24x1xf32>
    %90 = vector.broadcast %89 : vector<24x1xf32> to vector<24x32xf32>
    %91 = arith.subf %83, %90 : vector<24x32xf32>
    %92 = arith.mulf %91, %91 : vector<24x32xf32>
    %cst_36 = arith.constant dense<0.000000e+00> : vector<24xf32>
    %93 = vector.multi_reduction <add>, %92, %cst_36 [1] : vector<24x32xf32> to vector<24xf32>
    %94 = vector.shape_cast %93 : vector<24xf32> to vector<24x1xf32>
    %cst_37 = arith.constant 3.200000e+01 : f32
    %95 = vector.broadcast %cst_37 : f32 to vector<24x1xf32>
    %96 = arith.divf %94, %95 : vector<24x1xf32>
    %97 = vector.broadcast %89 : vector<24x1xf32> to vector<24x32xf32>
    %98 = arith.subf %83, %97 : vector<24x32xf32>
    %cst_38 = arith.constant 9.99999974E-6 : f32
    %99 = vector.broadcast %cst_38 : f32 to vector<24x1xf32>
    %100 = arith.addf %96, %99 : vector<24x1xf32>
    %101 = math.rsqrt %100 : vector<24x1xf32>
    %102 = vector.broadcast %101 : vector<24x1xf32> to vector<24x32xf32>
    %103 = arith.mulf %98, %102 : vector<24x32xf32>
    %104 = vector.broadcast %84 : vector<1x32xf32> to vector<24x32xf32>
    %105 = arith.mulf %103, %104 : vector<24x32xf32>
    %106 = vector.broadcast %85 : vector<1x32xf32> to vector<24x32xf32>
    %107 = arith.addf %105, %106 : vector<24x32xf32>
    %c0_39 = arith.constant 0 : index
    %c0_40 = arith.constant 0 : index
    %108 = vector.load %arg11[%c0_39, %c0_40] : memref<32x128xbf16, #tpu.memory_space<vmem>>, vector<32x128xbf16>
    %109 = arith.truncf %107 : vector<24x32xf32> to vector<24x32xbf16>
    %cst_41 = arith.constant dense<0.000000e+00> : vector<24x128xf32>
    %110 = tpu.matmul %109, %108, %cst_41 {dimension_numbers = #tpu.dot_dimension_numbers<[1], [0], [0], [1], [0, 0, 1, 1], [], []>} : vector<24x32xbf16>, vector<32x128xbf16>, vector<24x128xf32> -> vector<24x128xf32>
    %c0_42 = arith.constant 0 : index
    %c0_43 = arith.constant 0 : index
    %111 = vector.load %arg12[%c0_42, %c0_43] : memref<1x128xf32, #tpu.memory_space<vmem>>, vector<1x128xf32>
    %112 = vector.broadcast %111 : vector<1x128xf32> to vector<24x128xf32>
    %113 = arith.addf %110, %112 : vector<24x128xf32>
    %cst_44 = arith.constant 1.702000e+00 : f32
    %114 = vector.broadcast %cst_44 : f32 to vector<24x128xf32>
    %115 = arith.mulf %114, %113 : vector<24x128xf32>
    %116 = arith.negf %115 : vector<24x128xf32>
    %117 = math.exp %116 : vector<24x128xf32>
    %cst_45 = arith.constant 1.000000e+00 : f32
    %118 = vector.broadcast %cst_45 : f32 to vector<24x128xf32>
    %119 = arith.addf %118, %117 : vector<24x128xf32>
    %120 = arith.divf %118, %119 : vector<24x128xf32>
    %121 = arith.mulf %113, %120 : vector<24x128xf32>
    %c0_46 = arith.constant 0 : index
    %c0_47 = arith.constant 0 : index
    %122 = vector.load %arg13[%c0_46, %c0_47] : memref<128x32xbf16, #tpu.memory_space<vmem>>, vector<128x32xbf16>
    %123 = arith.truncf %121 : vector<24x128xf32> to vector<24x128xbf16>
    %cst_48 = arith.constant dense<0.000000e+00> : vector<24x32xf32>
    %124 = tpu.matmul %123, %122, %cst_48 {dimension_numbers = #tpu.dot_dimension_numbers<[1], [0], [0], [1], [0, 0, 1, 1], [], []>} : vector<24x128xbf16>, vector<128x32xbf16>, vector<24x32xf32> -> vector<24x32xf32>
    %125 = arith.addf %83, %124 : vector<24x32xf32>
    %c0_49 = arith.constant 0 : index
    %c0_50 = arith.constant 0 : index
    %126 = vector.load %arg14[%c0_49, %c0_50] : memref<1x32xf32, #tpu.memory_space<vmem>>, vector<1x32xf32>
    %127 = vector.broadcast %126 : vector<1x32xf32> to vector<24x32xf32>
    %128 = arith.addf %125, %127 : vector<24x32xf32>
    %129 = arith.truncf %128 : vector<24x32xf32> to vector<24x32xbf16>
    %c0_51 = arith.constant 0 : index
    %c0_52 = arith.constant 0 : index
    %c0_53 = arith.constant 0 : index
    %130 = vector.load %arg15[%c0_51, %c0_52, %c0_53] : memref<1x24x32xbf16, #tpu.memory_space<vmem>>, vector<1x24x32xbf16>
    %131 = vector.shape_cast %130 : vector<1x24x32xbf16> to vector<24x32xbf16>
    %132 = vector.shape_cast %129 : vector<24x32xbf16> to vector<1x24x32xbf16>
    tpu.vector_store %arg15[%c0_51, %c0_52, %c0_53], %132 {strides = array<i32>} : memref<1x24x32xbf16, #tpu.memory_space<vmem>>, vector<1x24x32xbf16>,
    return
  }
  func.func @transform_0(%arg0: i32) -> (i32, i32, i32) {
    %c0_i32 = arith.constant 0 : i32
    %c0_i32_0 = arith.constant 0 : i32
    %c0_i32_1 = arith.constant 0 : i32
    return %arg0, %c0_i32, %c0_i32_0 : i32, i32, i32
  }
  func.func @transform_1(%arg0: i32) -> (i32, i32) {
    %c0_i32 = arith.constant 0 : i32
    %c0_i32_0 = arith.constant 0 : i32
    %c0_i32_1 = arith.constant 0 : i32
    return %c0_i32, %c0_i32_0 : i32, i32
  }
  func.func @transform_2(%arg0: i32) -> (i32, i32) {
    %c0_i32 = arith.constant 0 : i32
    %c0_i32_0 = arith.constant 0 : i32
    %c0_i32_1 = arith.constant 0 : i32
    return %c0_i32, %c0_i32_0 : i32, i32
  }
  func.func @transform_3(%arg0: i32) -> (i32, i32) {
    %c0_i32 = arith.constant 0 : i32
    %c0_i32_0 = arith.constant 0 : i32
    %c0_i32_1 = arith.constant 0 : i32
    return %c0_i32, %c0_i32_0 : i32, i32
  }
  func.func @transform_4(%arg0: i32) -> (i32, i32) {
    %c0_i32 = arith.constant 0 : i32
    %c0_i32_0 = arith.constant 0 : i32
    %c0_i32_1 = arith.constant 0 : i32
    return %c0_i32, %c0_i32_0 : i32, i32
  }
  func.func @transform_5(%arg0: i32) -> (i32, i32) {
    %c0_i32 = arith.constant 0 : i32
    %c0_i32_0 = arith.constant 0 : i32
    %c0_i32_1 = arith.constant 0 : i32
    return %c0_i32, %c0_i32_0 : i32, i32
  }
  func.func @transform_6(%arg0: i32) -> (i32, i32) {
    %c0_i32 = arith.constant 0 : i32
    %c0_i32_0 = arith.constant 0 : i32
    %c0_i32_1 = arith.constant 0 : i32
    return %c0_i32, %c0_i32_0 : i32, i32
  }
  func.func @transform_7(%arg0: i32) -> (i32, i32) {
    %c0_i32 = arith.constant 0 : i32
    %c0_i32_0 = arith.constant 0 : i32
    %c0_i32_1 = arith.constant 0 : i32
    return %c0_i32, %c0_i32_0 : i32, i32
  }
  func.func @transform_8(%arg0: i32) -> (i32, i32) {
    %c0_i32 = arith.constant 0 : i32
    %c0_i32_0 = arith.constant 0 : i32
    %c0_i32_1 = arith.constant 0 : i32
    return %c0_i32, %c0_i32_0 : i32, i32
  }
  func.func @transform_9(%arg0: i32) -> (i32, i32) {
    %c0_i32 = arith.constant 0 : i32
    %c0_i32_0 = arith.constant 0 : i32
    %c0_i32_1 = arith.constant 0 : i32
    return %c0_i32, %c0_i32_0 : i32, i32
  }
  func.func @transform_10(%arg0: i32) -> (i32, i32) {
    %c0_i32 = arith.constant 0 : i32
    %c0_i32_0 = arith.constant 0 : i32
    %c0_i32_1 = arith.constant 0 : i32
    return %c0_i32, %c0_i32_0 : i32, i32
  }
  func.func @transform_11(%arg0: i32) -> (i32, i32) {
    %c0_i32 = arith.constant 0 : i32
    %c0_i32_0 = arith.constant 0 : i32
    %c0_i32_1 = arith.constant 0 : i32
    return %c0_i32, %c0_i32_0 : i32, i32
  }
  func.func @transform_12(%arg0: i32) -> (i32, i32) {
    %c0_i32 = arith.constant 0 : i32
    %c0_i32_0 = arith.constant 0 : i32
    %c0_i32_1 = arith.constant 0 : i32
    return %c0_i32, %c0_i32_0 : i32, i32
  }
  func.func @transform_13(%arg0: i32) -> (i32, i32) {
    %c0_i32 = arith.constant 0 : i32
    %c0_i32_0 = arith.constant 0 : i32
    %c0_i32_1 = arith.constant 0 : i32
    return %c0_i32, %c0_i32_0 : i32, i32
  }
  func.func @transform_14(%arg0: i32) -> (i32, i32, i32) {
    %c0_i32 = arith.constant 0 : i32
    %c0_i32_0 = arith.constant 0 : i32
    %c0_i32_1 = arith.constant 0 : i32
    return %arg0, %c0_i32, %c0_i32_0 : i32, i32, i32
  }
}

module attributes {stable_mosaic.version = 11 : i64} {
  func.func @_head_kernel(%arg0: memref<2x32xbf16, #tpu.memory_space<vmem>>, %arg1: memref<1x32xf32, #tpu.memory_space<vmem>>, %arg2: memref<1x32xf32, #tpu.memory_space<vmem>>, %arg3: memref<32x16xbf16, #tpu.memory_space<vmem>>, %arg4: memref<16x128xbf16, #tpu.memory_space<vmem>>, %arg5: memref<1x128xf32, #tpu.memory_space<vmem>>, %arg6: memref<2x128xf32, #tpu.memory_space<vmem>>) attributes {dimension_semantics = [], scalar_prefetch = 0 : i64, scratch_operands = 0 : i64, tpu.core_type = #tpu.core_type<tc>} {
    %c0 = arith.constant 0 : index
    %c0_0 = arith.constant 0 : index
    %0 = vector.load %arg0[%c0, %c0_0] : memref<2x32xbf16, #tpu.memory_space<vmem>>, vector<2x32xbf16>
    %1 = arith.extf %0 : vector<2x32xbf16> to vector<2x32xf32>
    %c0_1 = arith.constant 0 : index
    %c0_2 = arith.constant 0 : index
    %2 = vector.load %arg1[%c0_1, %c0_2] : memref<1x32xf32, #tpu.memory_space<vmem>>, vector<1x32xf32>
    %c0_3 = arith.constant 0 : index
    %c0_4 = arith.constant 0 : index
    %3 = vector.load %arg2[%c0_3, %c0_4] : memref<1x32xf32, #tpu.memory_space<vmem>>, vector<1x32xf32>
    %cst = arith.constant dense<0.000000e+00> : vector<2xf32>
    %4 = vector.multi_reduction <add>, %1, %cst [1] : vector<2x32xf32> to vector<2xf32>
    %5 = vector.shape_cast %4 : vector<2xf32> to vector<2x1xf32>
    %cst_5 = arith.constant 3.200000e+01 : f32
    %6 = vector.broadcast %cst_5 : f32 to vector<2x1xf32>
    %7 = arith.divf %5, %6 : vector<2x1xf32>
    %8 = vector.broadcast %7 : vector<2x1xf32> to vector<2x32xf32>
    %9 = arith.subf %1, %8 : vector<2x32xf32>
    %10 = arith.mulf %9, %9 : vector<2x32xf32>
    %cst_6 = arith.constant dense<0.000000e+00> : vector<2xf32>
    %11 = vector.multi_reduction <add>, %10, %cst_6 [1] : vector<2x32xf32> to vector<2xf32>
    %12 = vector.shape_cast %11 : vector<2xf32> to vector<2x1xf32>
    %cst_7 = arith.constant 3.200000e+01 : f32
    %13 = vector.broadcast %cst_7 : f32 to vector<2x1xf32>
    %14 = arith.divf %12, %13 : vector<2x1xf32>
    %15 = vector.broadcast %7 : vector<2x1xf32> to vector<2x32xf32>
    %16 = arith.subf %1, %15 : vector<2x32xf32>
    %cst_8 = arith.constant 9.99999974E-6 : f32
    %17 = vector.broadcast %cst_8 : f32 to vector<2x1xf32>
    %18 = arith.addf %14, %17 : vector<2x1xf32>
    %19 = math.rsqrt %18 : vector<2x1xf32>
    %20 = vector.broadcast %19 : vector<2x1xf32> to vector<2x32xf32>
    %21 = arith.mulf %16, %20 : vector<2x32xf32>
    %22 = vector.broadcast %2 : vector<1x32xf32> to vector<2x32xf32>
    %23 = arith.mulf %21, %22 : vector<2x32xf32>
    %24 = vector.broadcast %3 : vector<1x32xf32> to vector<2x32xf32>
    %25 = arith.addf %23, %24 : vector<2x32xf32>
    %c0_9 = arith.constant 0 : index
    %c0_10 = arith.constant 0 : index
    %26 = vector.load %arg3[%c0_9, %c0_10] : memref<32x16xbf16, #tpu.memory_space<vmem>>, vector<32x16xbf16>
    %27 = arith.truncf %25 : vector<2x32xf32> to vector<2x32xbf16>
    %cst_11 = arith.constant dense<0.000000e+00> : vector<2x16xf32>
    %28 = tpu.matmul %27, %26, %cst_11 {dimension_numbers = #tpu.dot_dimension_numbers<[1], [0], [0], [1], [0, 0, 1, 1], [], []>} : vector<2x32xbf16>, vector<32x16xbf16>, vector<2x16xf32> -> vector<2x16xf32>
    %c0_12 = arith.constant 0 : index
    %c0_13 = arith.constant 0 : index
    %29 = vector.load %arg4[%c0_12, %c0_13] : memref<16x128xbf16, #tpu.memory_space<vmem>>, vector<16x128xbf16>
    %30 = arith.truncf %28 : vector<2x16xf32> to vector<2x16xbf16>
    %cst_14 = arith.constant dense<0.000000e+00> : vector<2x128xf32>
    %31 = tpu.matmul %30, %29, %cst_14 {dimension_numbers = #tpu.dot_dimension_numbers<[1], [0], [0], [1], [0, 0, 1, 1], [], []>} : vector<2x16xbf16>, vector<16x128xbf16>, vector<2x128xf32> -> vector<2x128xf32>
    %c0_15 = arith.constant 0 : index
    %c0_16 = arith.constant 0 : index
    %32 = vector.load %arg5[%c0_15, %c0_16] : memref<1x128xf32, #tpu.memory_space<vmem>>, vector<1x128xf32>
    %33 = vector.broadcast %32 : vector<1x128xf32> to vector<2x128xf32>
    %34 = arith.addf %31, %33 : vector<2x128xf32>
    %c0_17 = arith.constant 0 : index
    %c0_18 = arith.constant 0 : index
    %35 = vector.load %arg6[%c0_17, %c0_18] : memref<2x128xf32, #tpu.memory_space<vmem>>, vector<2x128xf32>
    tpu.vector_store %arg6[%c0_17, %c0_18], %34 {strides = array<i32>} : memref<2x128xf32, #tpu.memory_space<vmem>>, vector<2x128xf32>,
    return
  }
}

</mosaic_0001>

<llo_original>
// kernel: clip_image_encoder_forward.4
$region0: #{clip_image_encoder_forward.4}
  #allocation0 [shape = 'u32[]', space=smem, size = 0x4, offset = 0x4, fixed_abs, tag = 'smem constant byte address 0x4 - core index']
  #allocation1 [shape = 'u32[72,128]{1,0:T(1,128)}', space=vmem, size = 0x9000, scoped, tag = 'internal scratch']
  %s0 = inlined_call_operand.vmem [shape: bf16[2,24,128], index: 0, kind: input, shape index: {}]
  %s1 = inlined_call_operand.vmem [shape: bf16[128,32], index: 1, kind: input, shape index: {}]
  %s2 = inlined_call_operand.vmem [shape: f32[24,32], index: 2, kind: input, shape index: {}]
  %s3 = inlined_call_operand.vmem [shape: f32[1,32], index: 3, kind: input, shape index: {}]
  %s4 = inlined_call_operand.vmem [shape: f32[1,32], index: 4, kind: input, shape index: {}]
  %s5 = inlined_call_operand.vmem [shape: bf16[2,24,32], index: 5, kind: output, shape index: {}]
  %s6 = sld [smem:[#allocation0]]
  $region53: #{clip_image_encoder_forward.4} parent=0
    _
  %s8 = ssub.s32 1, %s6
  %s9 = scalar_select 0, %s8, %s6
  loop: start=0, step=1, limit=4
  $region2: #{clip_image_encoder_forward.4} parent=0 // loop_pre_header
    _
  $region3: #{clip_image_encoder_forward.4} parent=0 // loop_header
    %s11 = sphi 0, %s15
    %p12 = scmp.ge.s32.totalorder %s11, 4
    %s21 = sphi 0, %s23
    %s24 = sphi 0, %s21
    %s25 = sphi 0, %s24
    %s41 = sphi 0, %s25
    %s45 = sphi 0, %s45
    %s47 = sphi 0, %s45
    %s48 = sphi 0, %s47
    %s62 = sphi 0, %s48
    %s66 = sphi 0, %s66
    %s68 = sphi 0, %s66
    %s69 = sphi 0, %s68
    %s83 = sphi 0, %s69
    %s87 = sphi 0, %s87
    %s89 = sphi 0, %s87
    %s90 = sphi 0, %s89
    %s104 = sphi 0, %s90
    %s108 = sphi 0, %s108
    %s110 = sphi 0, %s108
    %s111 = sphi 0, %s110
    %s125 = sphi 0, %s111
    %s131 = sphi 0, %s133
    %s134 = sphi 0, %s131
    %s135 = sphi 0, %s134
    %s151 = sphi 0, %s135
  $region4: #{clip_image_encoder_forward.4} parent=0 // loop_header_branch
    %14 = sbr.rel (%p12) target = $region8
  $region5: #{clip_image_encoder_forward.4} parent=0 // loop_body
    %s16 = ssub.s32 %s11, 1
    %s17 = ssub.s32 %s11, 2
    %s18 = sadd.s32 %s11, 1
    %s19 = ssub.s32 %s11, %s18
    %p20 = scmp.eq.s32.totalorder %s19, 0
    %s22 = sadd.s32 %s21, 1
    %s23 = scalar_select %p20, %s21, %s22
    %p26 = pneg %p20
    %p27 = scmp.eq.s32.totalorder %s11, 1
    %p28 = por %p26, %p27
    %p29 = scmp.ne.s32.totalorder %s21, %s24
    %p30 = scmp.eq.s32.totalorder %s11, 0
    %p31 = por %p29, %p30
    %p32 = scmp.ne.s32.totalorder %s21, %s24
    %p33 = scmp.eq.s32.totalorder %s16, 1
    %p34 = por %p32, %p33
    %p35 = scmp.ne.s32.totalorder %s24, %s25
    %p36 = scmp.eq.s32.totalorder %s16, 0
    %p37 = por %p35, %p36
    %p38 = scmp.ne.s32.totalorder %s24, %s25
    %p39 = scmp.eq.s32.totalorder %s17, 1
    %p40 = por %p38, %p39
    %p42 = scmp.ne.s32.totalorder %s25, %s41
    %p43 = scmp.eq.s32.totalorder %s17, 0
    %p44 = por %p42, %p43
    %s46 = sadd.s32 %s45, 1
    %p49 = scmp.eq.s32.totalorder %s11, 1
    %p50 = scmp.ne.s32.totalorder %s45, %s47
    %p51 = scmp.eq.s32.totalorder %s11, 0
    %p52 = por %p50, %p51
    %p53 = scmp.ne.s32.totalorder %s45, %s47
    %p54 = scmp.eq.s32.totalorder %s16, 1
    %p55 = por %p53, %p54
    %p56 = scmp.ne.s32.totalorder %s47, %s48
    %p57 = scmp.eq.s32.totalorder %s16, 0
    %p58 = por %p56, %p57
    %p59 = scmp.ne.s32.totalorder %s47, %s48
    %p60 = scmp.eq.s32.totalorder %s17, 1
    %p61 = por %p59, %p60
    %p63 = scmp.ne.s32.totalorder %s48, %s62
    %p64 = scmp.eq.s32.totalorder %s17, 0
    %p65 = por %p63, %p64
    %s67 = sadd.s32 %s66, 1
    %p70 = scmp.eq.s32.totalorder %s11, 1
    %p71 = scmp.ne.s32.totalorder %s66, %s68
    %p72 = scmp.eq.s32.totalorder %s11, 0
    %p73 = por %p71, %p72
    %p74 = scmp.ne.s32.totalorder %s66, %s68
    %p75 = scmp.eq.s32.totalorder %s16, 1
    %p76 = por %p74, %p75
    %p77 = scmp.ne.s32.totalorder %s68, %s69
    %p78 = scmp.eq.s32.totalorder %s16, 0
    %p79 = por %p77, %p78
    %p80 = scmp.ne.s32.totalorder %s68, %s69
    %p81 = scmp.eq.s32.totalorder %s17, 1
    %p82 = por %p80, %p81
    %p84 = scmp.ne.s32.totalorder %s69, %s83
    %p85 = scmp.eq.s32.totalorder %s17, 0
    %p86 = por %p84, %p85
    %s88 = sadd.s32 %s87, 1
    %p91 = scmp.eq.s32.totalorder %s11, 1
    %p92 = scmp.ne.s32.totalorder %s87, %s89
    %p93 = scmp.eq.s32.totalorder %s11, 0
    %p94 = por %p92, %p93
    %p95 = scmp.ne.s32.totalorder %s87, %s89
    %p96 = scmp.eq.s32.totalorder %s16, 1
    %p97 = por %p95, %p96
    %p98 = scmp.ne.s32.totalorder %s89, %s90
    %p99 = scmp.eq.s32.totalorder %s16, 0
    %p100 = por %p98, %p99
    %p101 = scmp.ne.s32.totalorder %s89, %s90
    %p102 = scmp.eq.s32.totalorder %s17, 1
    %p103 = por %p101, %p102
    %p105 = scmp.ne.s32.totalorder %s90, %s104
    %p106 = scmp.eq.s32.totalorder %s17, 0
    %p107 = por %p105, %p106
    %s109 = sadd.s32 %s108, 1
    %p112 = scmp.eq.s32.totalorder %s11, 1
    %p113 = scmp.ne.s32.totalorder %s108, %s110
    %p114 = scmp.eq.s32.totalorder %s11, 0
    %p115 = por %p113, %p114
    %p116 = scmp.ne.s32.totalorder %s108, %s110
    %p117 = scmp.eq.s32.totalorder %s16, 1
    %p118 = por %p116, %p117
    %p119 = scmp.ne.s32.totalorder %s110, %s111
    %p120 = scmp.eq.s32.totalorder %s16, 0
    %p121 = por %p119, %p120
    %p122 = scmp.ne.s32.totalorder %s110, %s111
    %p123 = scmp.eq.s32.totalorder %s17, 1
    %p124 = por %p122, %p123
    %p126 = scmp.ne.s32.totalorder %s111, %s125
    %p127 = scmp.eq.s32.totalorder %s17, 0
    %p128 = por %p126, %p127
    %s129 = ssub.s32 %s11, %s18
    %p130 = scmp.eq.s32.totalorder %s129, 0
    %s132 = sadd.s32 %s131, 1
    %s133 = scalar_select %p130, %s131, %s132
    %p136 = pneg %p130
    %p137 = scmp.eq.s32.totalorder %s11, 1
    %p138 = por %p136, %p137
    %p139 = scmp.ne.s32.totalorder %s131, %s134
    %p140 = scmp.eq.s32.totalorder %s11, 0
    %p141 = por %p139, %p140
    %p142 = scmp.ne.s32.totalorder %s131, %s134
    %p143 = scmp.eq.s32.totalorder %s16, 1
    %p144 = por %p142, %p143
    %p145 = scmp.ne.s32.totalorder %s134, %s135
    %p146 = scmp.eq.s32.totalorder %s16, 0
    %p147 = por %p145, %p146
    %p148 = scmp.ne.s32.totalorder %s134, %s135
    %p149 = scmp.eq.s32.totalorder %s17, 1
    %p150 = por %p148, %p149
    %p152 = scmp.ne.s32.totalorder %s135, %s151
    %p153 = scmp.eq.s32.totalorder %s17, 0
    %p154 = por %p152, %p153
    %p155 = scmp.le.s32.totalorder 1, %s11
    %p156 = scmp.lt.s32.totalorder %s11, 3
    %p157 = pnand %p155, %p156
    %p158 = pneg %p157
    // Predicated region
    $region9: #{clip_image_encoder_forward.4} parent=5 // pred_check
      _
    $region10: #{clip_image_encoder_forward.4} parent=5 // pred_check_branch
      %160 = sbr.rel (%p157) target = $region12
    $region11: #{clip_image_encoder_forward.4} parent=5 // pred_region
      %s161 = ssub.s32 %s11, 1
      // Predicated region
      $region13: #{clip_image_encoder_forward.4} parent=11 // pred_check
        %p162 = pneg %p58
      $region14: #{clip_image_encoder_forward.4} parent=11 // pred_check_branch
        %164 = sbr.rel (%p162) target = $region16
      $region15: #{clip_image_encoder_forward.4} parent=11 // pred_region
        _
      $region16: #{clip_image_encoder_forward.4} parent=11 // pred_fallthru
        _
      // Predicated region
      $region17: #{clip_image_encoder_forward.4} parent=11 // pred_check
        %p165 = pneg %p79
      $region18: #{clip_image_encoder_forward.4} parent=11 // pred_check_branch
        %167 = sbr.rel (%p165) target = $region20
      $region19: #{clip_image_encoder_forward.4} parent=11 // pred_region
        _
      $region20: #{clip_image_encoder_forward.4} parent=11 // pred_fallthru
        _
      // Predicated region
      $region21: #{clip_image_encoder_forward.4} parent=11 // pred_check
        %p168 = pneg %p100
      $region22: #{clip_image_encoder_forward.4} parent=11 // pred_check_branch
        %170 = sbr.rel (%p168) target = $region24
      $region23: #{clip_image_encoder_forward.4} parent=11 // pred_region
        _
      $region24: #{clip_image_encoder_forward.4} parent=11 // pred_fallthru
        _
      // Predicated region
      $region25: #{clip_image_encoder_forward.4} parent=11 // pred_check
        %p171 = pneg %p121
      $region26: #{clip_image_encoder_forward.4} parent=11 // pred_check_branch
        %173 = sbr.rel (%p171) target = $region28
      $region27: #{clip_image_encoder_forward.4} parent=11 // pred_region
        _
      $region28: #{clip_image_encoder_forward.4} parent=11 // pred_fallthru
        _
    $region12: #{clip_image_encoder_forward.4} parent=5 // pred_fallthru
      _
    %p174 = scmp.lt.s32.totalorder %s11, 2
    // Predicated region
    $region29: #{clip_image_encoder_forward.4} parent=5 // pred_check
      %p175 = pneg %p174
    $region30: #{clip_image_encoder_forward.4} parent=5 // pred_check_branch
      %177 = sbr.rel (%p175) target = $region32
    $region31: #{clip_image_encoder_forward.4} parent=5 // pred_region
      // Predicated region
      $region33: #{clip_image_encoder_forward.4} parent=31 // pred_check
        %p178 = pneg %p31
      $region34: #{clip_image_encoder_forward.4} parent=31 // pred_check_branch
        %180 = sbr.rel (%p178) target = $region36
      $region35: #{clip_image_encoder_forward.4} parent=31 // pred_region
        %p181 = scmp.lt.s32.totalorder %s11, 1
        %s182 = scalar_select %p181, %s11, 1
        %s183 = smul.addr %s182, 3
        %s184 = smul.addr %s183, 4
        %s185 = scalar_lea.vmem %s0, %s184
      $region36: #{clip_image_encoder_forward.4} parent=31 // pred_fallthru
        _
    $region32: #{clip_image_encoder_forward.4} parent=5 // pred_fallthru
      _
    %p186 = scmp.le.s32.totalorder 1, %s11
    %p187 = scmp.lt.s32.totalorder %s11, 3
    %p188 = pnand %p186, %p187
    %p189 = pneg %p188
    // Predicated region
    $region37: #{clip_image_encoder_forward.4} parent=5 // pred_check
      _
    $region38: #{clip_image_encoder_forward.4} parent=5 // pred_check_branch
      %191 = sbr.rel (%p188) target = $region40
    $region39: #{clip_image_encoder_forward.4} parent=5 // pred_region
      %s192 = ssub.s32 %s11, 1
      %p193 = scmp.lt.s32.totalorder %s16, 1
      %s194 = scalar_select %p193, %s16, 1
      %s195 = smul.addr %s194, 3
      %s196 = smul.addr %s195, 4
      %s197 = scalar_lea.vmem %s0, %s196
      %p198 = pneg %p37
      %p199 = pneg %p34
      %p200 = pneg %p58
      %p201 = pneg %p55
      %p202 = pneg %p79
      %p203 = pneg %p76
      %p204 = pneg %p100
      %p205 = pneg %p97
      %p206 = pneg %p121
      %p207 = pneg %p118
      %p208 = pneg %p147
      %p209 = pneg %p144
      %p210 = scmp.lt.s32.totalorder %s16, 1
      %s211 = scalar_select %p210, %s16, 1
      %s212 = smul.addr %s211, 3
      %s213 = smul.addr %s212, 4
      %s214 = scalar_lea.vmem %s5, %s213
      %p215 = scmp.lt.s32.totalorder %s16, 1
      %s216 = scalar_select %p215, %s16, 1
      %s217 = smul.addr %s216, 3
      %s218 = smul.addr %s217, 4
      %s219 = scalar_lea.vmem %s0, %s218
      %p220 = scmp.lt.s32.totalorder %s16, 1
      %s221 = scalar_select %p220, %s16, 1
      %s222 = smul.addr %s221, 3
      %s223 = smul.addr %s222, 4
      %s224 = scalar_lea.vmem %s5, %s223
      %v225 = vld [vmem:[%s219] sm:$0xf]
      %v226 = vld [vmem:[%s219 + $0x4] sm:$0xf]
      %v227 = vld [vmem:[%s219 + $0x8] sm:$0xf]
      %v228 = vld [vmem:[%s1] sm:$0xf]
      %v229 = vld [vmem:[%s1 + $0x4] sm:$0xf]
      %v230 = vld [vmem:[%s1 + $0x8] sm:$0xf]
      %v231 = vld [vmem:[%s1 + $0xc] sm:$0xf]
      %v232 = vld [vmem:[%s1 + $0x10] sm:$0xf]
      %v233 = vld [vmem:[%s1 + $0x14] sm:$0xf]
      %v234 = vld [vmem:[%s1 + $0x18] sm:$0xf]
      %v235 = vld [vmem:[%s1 + $0x1c] sm:$0xf]
      %v236 = vld [vmem:[%s1 + $0x20] sm:$0xf]
      %v237 = vld [vmem:[%s1 + $0x24] sm:$0xf]
      %v238 = vld [vmem:[%s1 + $0x28] sm:$0xf]
      %v239 = vld [vmem:[%s1 + $0x2c] sm:$0xf]
      %v240 = vld [vmem:[%s1 + $0x30] sm:$0xf]
      %v241 = vld [vmem:[%s1 + $0x34] sm:$0xf]
      %v242 = vld [vmem:[%s1 + $0x38] sm:$0xf]
      %v243 = vld [vmem:[%s1 + $0x3c] sm:$0xf]
      %v244 = vld [vmem:[%s2] sm:$0xff]
      %v245 = vld [vmem:[%s2 + $0x8] sm:$0xff]
      %v246 = vld [vmem:[%s2 + $0x10] sm:$0xff]
      %v250 = vunpack.c.l.b16 %v225
      %v251 = vunpack.c.l.b16 %v226
      %v252 = vunpack.c.l.b16 %v227
      %v253 = vpack.c.b16 %v251, %v250
      %v254 = vpack.c.b16 %v252, %v252
      %v273 = vunpack.c.l.b16 %v228
      %v274 = vunpack.c.l.b16 %v229
      %v275 = vunpack.c.l.b16 %v230
      %v276 = vunpack.c.l.b16 %v231
      %v277 = vunpack.c.l.b16 %v232
      %v278 = vunpack.c.l.b16 %v233
      %v279 = vunpack.c.l.b16 %v234
      %v280 = vunpack.c.l.b16 %v235
      %v281 = vunpack.c.l.b16 %v236
      %v282 = vunpack.c.l.b16 %v237
      %v283 = vunpack.c.l.b16 %v238
      %v284 = vunpack.c.l.b16 %v239
      %v285 = vunpack.c.l.b16 %v240
      %v286 = vunpack.c.l.b16 %v241
      %v287 = vunpack.c.l.b16 %v242
      %v288 = vunpack.c.l.b16 %v243
      %v289 = vpack.c.b16 %v274, %v273
      %v290 = vpack.c.b16 %v276, %v275
      %v291 = vpack.c.b16 %v278, %v277
      %v292 = vpack.c.b16 %v280, %v279
      %v293 = vpack.c.b16 %v282, %v281
      %v294 = vpack.c.b16 %v284, %v283
      %v295 = vpack.c.b16 %v286, %v285
      %v296 = vpack.c.b16 %v288, %v287
      %305 = vmatpush.bf16.msra.mxu0 %v296
      %306 = vmatpush.bf16.msra.mxu0 %v295
      %307 = vmatpush.bf16.msra.mxu0 %v294
      %308 = vmatpush.bf16.msra.mxu0 %v293
      %309 = vmatpush.bf16.msra.mxu0 %v292
      %310 = vmatpush.bf16.msra.mxu0 %v291
      %311 = vmatpush.bf16.msra.mxu0 %v290
      %312 = vmatpush.bf16.msra.mxu0 %v289
      %313 = vmatmul.bf16.gmra.mxu0 %v253
      %v314 = vpop.f32.mrf.mxu0
      %v315 = vadd.f32 %v244, %v314
      %v316 = vpop.f32.mrf.mxu0
      %v317 = vadd.f32 %v245, %v316
      %318 = vmatmul.bf16.gmra.mxu0 %v254
      %v319 = vpop.f32.mrf.mxu0
      %v320 = vadd.f32 %v246, %v319
      %v321 = vpop.f32.mrf.mxu0
      %322 = vdwg.mxu0
      %v323 = vld [vmem:[%s3] sm:$0x1]
      %v324 = vld [vmem:[%s4] sm:$0x1]
      %vm325 = vcmask 261120
      %v326 = vsel %vm325, %v315, 0.0
      %327 = vadd.xlane.f32.xlu0 %v326
      %v328 = vpop.xlane.xlu0 %327
      %v329 = vsel %vm325, %v317, 0.0
      %330 = vadd.xlane.f32.xlu0 %v329
      %v331 = vpop.xlane.xlu0 %330
      %v332 = vsel %vm325, %v320, 0.0
      %333 = vadd.xlane.f32.xlu0 %v332
      %v334 = vpop.xlane.xlu0 %333
      %v335 = vrcp.pop 32.0
      %v336 = vmul.f32 32.0, %v335
      %v337 = vsub.f32 1.0, %v336
      %v338 = vmul.f32 %v335, %v337
      %v339 = vadd.f32 %v335, %v338
      %vm340 = vweird.f32 %v335
      %v341 = vsel %vm340, %v335, %v339
      %v342 = vmul.f32 %v328, %v341
      %v343 = vmul.f32 %v331, %v341
      %v344 = vmul.f32 %v334, %v341
      %v345 = vsub.f32 %v315, %v342
      %v346 = vsub.f32 %v317, %v343
      %v347 = vsub.f32 %v320, %v344
      %v348 = vmul.f32 %v345, %v345
      %v349 = vmul.f32 %v346, %v346
      %v350 = vmul.f32 %v347, %v347
      %v351 = vsel %vm325, %v348, 0.0
      %352 = vadd.xlane.f32.xlu0 %v351
      %v353 = vpop.xlane.xlu0 %352
      %v354 = vsel %vm325, %v349, 0.0
      %355 = vadd.xlane.f32.xlu0 %v354
      %v356 = vpop.xlane.xlu0 %355
      %v357 = vsel %vm325, %v350, 0.0
      %358 = vadd.xlane.f32.xlu0 %v357
      %v359 = vpop.xlane.xlu0 %358
      %v360 = vmul.f32 %v353, %v341
      %v361 = vmul.f32 %v356, %v341
      %v362 = vmul.f32 %v359, %v341
      %v363 = vadd.f32 %v360, 1e-05
      %v364 = vadd.f32 %v361, 1e-05
      %v365 = vadd.f32 %v362, 1e-05
      %v366 = vrsqrt.pop %v363
      %v367 = vmul.f32 %v366, %v363
      %v368 = vmul.f32 %v367, %v366
      %v369 = vmul.f32 0.5, %v368
      %v370 = vsub.f32 1.5, %v369
      %v371 = vmul.f32 %v366, %v370
      %vm372 = vweird.f32 %v363
      %vm373 = vweird.f32 %v366
      %vm374 = vmor %vm372, %vm373
      %v375 = vsel %vm374, %v366, %v371
      %v376 = vrsqrt.pop %v364
      %v377 = vmul.f32 %v376, %v364
      %v378 = vmul.f32 %v377, %v376
      %v379 = vmul.f32 0.5, %v378
      %v380 = vsub.f32 1.5, %v379
      %v381 = vmul.f32 %v376, %v380
      %vm382 = vweird.f32 %v364
      %vm383 = vweird.f32 %v376
      %vm384 = vmor %vm382, %vm383
      %v385 = vsel %vm384, %v376, %v381
      %v386 = vrsqrt.pop %v365
      %v387 = vmul.f32 %v386, %v365
      %v388 = vmul.f32 %v387, %v386
      %v389 = vmul.f32 0.5, %v388
      %v390 = vsub.f32 1.5, %v389
      %v391 = vmul.f32 %v386, %v390
      %vm392 = vweird.f32 %v365
      %vm393 = vweird.f32 %v386
      %vm394 = vmor %vm392, %vm393
      %v395 = vsel %vm394, %v386, %v391
      %v396 = vmul.f32 %v345, %v375
      %v397 = vmul.f32 %v346, %v385
      %v398 = vmul.f32 %v347, %v395
      %v400 = vperm.slane %v323, 0
      %v402 = vmul.f32 %v396, %v400
      %v403 = vmul.f32 %v397, %v400
      %v404 = vmul.f32 %v398, %v400
      %v406 = vperm.slane %v324, 0
      %v408 = vadd.f32 %v402, %v406
      %v409 = vadd.f32 %v403, %v406
      %v410 = vadd.f32 %v404, %v406
      %v411 = vpack.c.bf16 %v408, %v408
      %v412 = vpack.c.bf16 %v409, %v409
      %v413 = vpack.c.bf16 %v410, %v410
      %vm414 = vcmask 257024
      %415 = vst.msk [vmem:[%s224] sm:$0xf] %vm414, %v411
      %416 = vst.msk [vmem:[%s224 + $0x4] sm:$0xf] %vm414, %v412
      %417 = vst.msk [vmem:[%s224 + $0x8] sm:$0xf] %vm414, %v413
      %p418 = scmp.lt.s32.totalorder %s16, 1
      %s419 = scalar_select %p418, %s16, 1
      %s420 = smul.addr %s419, 3
      %s421 = smul.addr %s420, 4
      %s422 = scalar_lea.vmem %s5, %s421
      // Predicated region
      $region41: #{clip_image_encoder_forward.4} parent=39 // pred_check
        %p423 = pneg %p144
      $region42: #{clip_image_encoder_forward.4} parent=39 // pred_check_branch
        %425 = sbr.rel (%p423) target = $region44
      $region43: #{clip_image_encoder_forward.4} parent=39 // pred_region
        _
      $region44: #{clip_image_encoder_forward.4} parent=39 // pred_fallthru
        _
    $region40: #{clip_image_encoder_forward.4} parent=5 // pred_fallthru
      _
    %p426 = scmp.le.s32.totalorder 2, %s11
    // Predicated region
    $region45: #{clip_image_encoder_forward.4} parent=5 // pred_check
      %p427 = pneg %p426
    $region46: #{clip_image_encoder_forward.4} parent=5 // pred_check_branch
      %429 = sbr.rel (%p427) target = $region48
    $region47: #{clip_image_encoder_forward.4} parent=5 // pred_region
      %s430 = ssub.s32 %s11, 2
      // Predicated region
      $region49: #{clip_image_encoder_forward.4} parent=47 // pred_check
        %p431 = pneg %p150
      $region50: #{clip_image_encoder_forward.4} parent=47 // pred_check_branch
        %433 = sbr.rel (%p431) target = $region52
      $region51: #{clip_image_encoder_forward.4} parent=47 // pred_region
        %p434 = scmp.lt.s32.totalorder %s17, 1
        %s435 = scalar_select %p434, %s17, 1
        %s436 = smul.addr %s435, 3
        %s437 = smul.addr %s436, 4
        %s438 = scalar_lea.vmem %s5, %s437
      $region52: #{clip_image_encoder_forward.4} parent=47 // pred_fallthru
        _
    $region48: #{clip_image_encoder_forward.4} parent=5 // pred_fallthru
      _
  $region6: #{clip_image_encoder_forward.4} parent=0 // loop_footer
    %s15 = sadd.s32 1, %s11
  $region7: #{clip_image_encoder_forward.4} parent=0 // loop_footer_branch
    %10 = sbr.rel target = $region3
  $region8: #{clip_image_encoder_forward.4} parent=0 // loop_exit
    _

// kernel: clip_image_encoder_forward.7
$region0: #{clip_image_encoder_forward.7}
  #allocation0 [shape = 'u32[]', space=smem, size = 0x4, offset = 0x4, fixed_abs, tag = 'smem constant byte address 0x4 - core index']
  #allocation1 [shape = 'u32[72,128]{1,0:T(1,128)}', space=vmem, size = 0x9000, scoped, tag = 'internal scratch']
  %s0 = inlined_call_operand.vmem [shape: bf16[2,32], index: 0, kind: input, shape index: {}]
  %s1 = inlined_call_operand.vmem [shape: f32[1,32], index: 1, kind: input, shape index: {}]
  %s2 = inlined_call_operand.vmem [shape: f32[1,32], index: 2, kind: input, shape index: {}]
  %s3 = inlined_call_operand.vmem [shape: bf16[32,16], index: 3, kind: input, shape index: {}]
  %s4 = inlined_call_operand.vmem [shape: bf16[16,128], index: 4, kind: input, shape index: {}]
  %s5 = inlined_call_operand.vmem [shape: f32[1,128], index: 5, kind: input, shape index: {}]
  %s6 = inlined_call_operand.hbm [shape: f32[2,128], index: 6, kind: output, shape index: {}]
  %s7 = sld [smem:[#allocation0]]
  $region34: #{clip_image_encoder_forward.7} parent=0
    _
  %s9 = ssub.s32 1, %s7
  %s10 = scalar_select 0, %s9, %s7
  $region1: #{clip_image_encoder_forward.7} parent=0
    #allocation2 [shape = 'u8[1024]{0}', space=vmem, size = 0x400, scoped, tag = 'output window, operand 0, single buffered']
    #allocation3 [shape = 's32[1]{0}', space=sflag, size = 0x4, scoped, tag = 'scoped memory for clip_image_encoder_forward.7']
    %11 = vsyncpa [#allocation3], 0
    // Predicated region
    $region2: #{clip_image_encoder_forward.7} parent=1 // pred_check
      _
    $region3: #{clip_image_encoder_forward.7} parent=1 // pred_check_branch
      %13 = sbr.rel (0) target = $region5
    $region4: #{clip_image_encoder_forward.7} parent=1 // pred_region
      _
    $region5: #{clip_image_encoder_forward.7} parent=1 // pred_fallthru
      _
    // Predicated region
    $region6: #{clip_image_encoder_forward.7} parent=1 // pred_check
      _
    $region7: #{clip_image_encoder_forward.7} parent=1 // pred_check_branch
      %15 = sbr.rel (0) target = $region9
    $region8: #{clip_image_encoder_forward.7} parent=1 // pred_region
      _
    $region9: #{clip_image_encoder_forward.7} parent=1 // pred_fallthru
      _
    // Predicated region
    $region10: #{clip_image_encoder_forward.7} parent=1 // pred_check
      _
    $region11: #{clip_image_encoder_forward.7} parent=1 // pred_check_branch
      %17 = sbr.rel (0) target = $region13
    $region12: #{clip_image_encoder_forward.7} parent=1 // pred_region
      _
    $region13: #{clip_image_encoder_forward.7} parent=1 // pred_fallthru
      _
    // Predicated region
    $region14: #{clip_image_encoder_forward.7} parent=1 // pred_check
      _
    $region15: #{clip_image_encoder_forward.7} parent=1 // pred_check_branch
      %19 = sbr.rel (0) target = $region17
    $region16: #{clip_image_encoder_forward.7} parent=1 // pred_region
      _
    $region17: #{clip_image_encoder_forward.7} parent=1 // pred_fallthru
      _
    // Predicated region
    $region18: #{clip_image_encoder_forward.7} parent=1 // pred_check
      _
    $region19: #{clip_image_encoder_forward.7} parent=1 // pred_check_branch
      %21 = sbr.rel (0) target = $region21
    $region20: #{clip_image_encoder_forward.7} parent=1 // pred_region
      _
    $region21: #{clip_image_encoder_forward.7} parent=1 // pred_fallthru
      _
    // Predicated region
    $region22: #{clip_image_encoder_forward.7} parent=1 // pred_check
      _
    $region23: #{clip_image_encoder_forward.7} parent=1 // pred_check_branch
      %23 = sbr.rel (0) target = $region25
    $region24: #{clip_image_encoder_forward.7} parent=1 // pred_region
      _
    $region25: #{clip_image_encoder_forward.7} parent=1 // pred_fallthru
      _
    %v25 = vld [vmem:[%s0] sm:$0x1]
    %v26 = vunpack.c.l.bf16 %v25
    %v27 = vld [vmem:[%s1] sm:$0x1]
    %v28 = vld [vmem:[%s2] sm:$0x1]
    %vm29 = vcmask 254976
    %v30 = vsel %vm29, %v26, 0.0
    %31 = vadd.xlane.f32.xlu0 %v30
    %v32 = vpop.xlane.xlu0 %31
    %v33 = vrcp.pop 32.0
    %v34 = vmul.f32 32.0, %v33
    %v35 = vsub.f32 1.0, %v34
    %v36 = vmul.f32 %v33, %v35
    %v37 = vadd.f32 %v33, %v36
    %vm38 = vweird.f32 %v33
    %v39 = vsel %vm38, %v33, %v37
    %v40 = vmul.f32 %v32, %v39
    %v41 = vsub.f32 %v26, %v40
    %v42 = vmul.f32 %v41, %v41
    %v43 = vsel %vm29, %v42, 0.0
    %44 = vadd.xlane.f32.xlu0 %v43
    %v45 = vpop.xlane.xlu0 %44
    %v46 = vmul.f32 %v45, %v39
    %v47 = vadd.f32 %v46, 1e-05
    %v48 = vrsqrt.pop %v47
    %v49 = vmul.f32 %v48, %v47
    %v50 = vmul.f32 %v49, %v48
    %v51 = vmul.f32 0.5, %v50
    %v52 = vsub.f32 1.5, %v51
    %v53 = vmul.f32 %v48, %v52
    %vm54 = vweird.f32 %v47
    %vm55 = vweird.f32 %v48
    %vm56 = vmor %vm54, %vm55
    %v57 = vsel %vm56, %v48, %v53
    %v58 = vmul.f32 %v41, %v57
    %v60 = vperm.slane %v27, 0
    %v62 = vmul.f32 %v58, %v60
    %v64 = vperm.slane %v28, 0
    %v66 = vadd.f32 %v62, %v64
    %v67 = vld [vmem:[%s3] sm:$0xf]
    %v68 = vld [vmem:[%s3 + $0x4] sm:$0xf]
    %v69 = vld [vmem:[%s3 + $0x8] sm:$0xf]
    %v70 = vld [vmem:[%s3 + $0xc] sm:$0xf]
    %v71 = vpack.c.bf16 %v66, %v66
    %v76 = vunpack.c.l.b16 %v67
    %v77 = vunpack.c.l.b16 %v68
    %v78 = vunpack.c.l.b16 %v69
    %v79 = vunpack.c.l.b16 %v70
    %v80 = vpack.c.b16 %v77, %v76
    %v81 = vpack.c.b16 %v79, %v78
    %vm84 = vcmask 261120
    %v86 = vsel %vm84, %v71, 0
    %88 = vmatpush.bf16.msra.mxu0 0
    %89 = vmatpush.bf16.msra.mxu0 0
    %90 = vmatpush.bf16.msra.mxu0 0
    %91 = vmatpush.bf16.msra.mxu0 0
    %92 = vmatpush.bf16.msra.mxu0 0
    %93 = vmatpush.bf16.msra.mxu0 0
    %94 = vmatpush.bf16.msra.mxu0 %v81
    %95 = vmatpush.bf16.msra.mxu0 %v80
    %96 = vmatmul.bf16.gmra.mxu0 %v86
    %v97 = vpop.f32.mrf.mxu0
    %v98 = vadd.f32 0.0, %v97
    %v99 = vpop.f32.mrf.mxu0
    %100 = vdwg.mxu0
    %v101 = vld [vmem:[%s4] sm:$0xf]
    %v102 = vld [vmem:[%s4 + $0x4] sm:$0xf]
    %v103 = vpack.c.bf16 %v98, %v98
    %v104 = vld [vmem:[%s5] sm:$0x1]
    %v106 = vperm.slane %v104, 0
    %v110 = vunpack.c.l.b16 %v101
    %v111 = vunpack.c.l.b16 %v102
    %v112 = vpack.c.b16 %v111, %v110
    %vm114 = vcmask 130048
    %v116 = vsel %vm114, %v103, 0
    %118 = vmatpush.bf16.msra.mxu0 0
    %119 = vmatpush.bf16.msra.mxu0 0
    %120 = vmatpush.bf16.msra.mxu0 0
    %121 = vmatpush.bf16.msra.mxu0 0
    %122 = vmatpush.bf16.msra.mxu0 0
    %123 = vmatpush.bf16.msra.mxu0 0
    %124 = vmatpush.bf16.msra.mxu0 0
    %125 = vmatpush.bf16.msra.mxu0 %v112
    %126 = vmatmul.bf16.gmra.mxu0 %v116
    %v127 = vpop.f32.mrf.mxu0
    %v128 = vadd.f32 %v106, %v127
    %v129 = vpop.f32.mrf.mxu0
    %130 = vdwg.mxu0
    %131 = vst [vmem:[#allocation2] sm:$0x3] %v128
    // Predicated region
    $region26: #{clip_image_encoder_forward.7} parent=1 // pred_check
      _
    $region27: #{clip_image_encoder_forward.7} parent=1 // pred_check_branch
      %133 = sbr.rel (0) target = $region29
    $region28: #{clip_image_encoder_forward.7} parent=1 // pred_region
      %135 = vsyncadd [#allocation3], 0
      %s137 = sshll.u32 [#allocation2], 4
      %s138 = int_to_ptr.vmem [resolvable:$true] %s137
      %s139 = sshll.u32 %s6, 4
      %s140 = int_to_ptr.hbm [resolvable:$true] %s139
      %142 = dma.vmem_to_hbm [thread:$0]  %s138, 32, %s140, [#allocation3]
    $region29: #{clip_image_encoder_forward.7} parent=1 // pred_fallthru
      _
    // Predicated region
    $region30: #{clip_image_encoder_forward.7} parent=1 // pred_check
      _
    $region31: #{clip_image_encoder_forward.7} parent=1 // pred_check_branch
      %144 = sbr.rel (0) target = $region33
    $region32: #{clip_image_encoder_forward.7} parent=1 // pred_region
      %146 = dma.done [#allocation3], 32
    $region33: #{clip_image_encoder_forward.7} parent=1 // pred_fallthru
      _
    %147 = vsyncpa [#allocation3], 1

// kernel: clip_image_encoder_forward.5
$region0: #{clip_image_encoder_forward.5}
  #allocation0 [shape = 'u32[]', space=smem, size = 0x4, offset = 0x4, fixed_abs, tag = 'smem constant byte address 0x4 - core index']
  #allocation1 [shape = 'u32[72,128]{1,0:T(1,128)}', space=vmem, size = 0x9000, scoped, tag = 'internal scratch']
  %s0 = inlined_call_operand.vmem [shape: bf16[2,24,32], index: 0, kind: input, shape index: {}]
  %s1 = inlined_call_operand.vmem [shape: f32[1,24], index: 1, kind: input, shape index: {}]
  %s2 = inlined_call_operand.vmem [shape: f32[1,32], index: 2, kind: input, shape index: {}, may-alias: {2,8}]
  %s3 = inlined_call_operand.vmem [shape: f32[1,32], index: 3, kind: input, shape index: {}, may-alias: {3,9}]
  %s4 = inlined_call_operand.vmem [shape: bf16[32,96], index: 4, kind: input, shape index: {}]
  %s5 = inlined_call_operand.vmem [shape: f32[1,96], index: 5, kind: input, shape index: {}]
  %s6 = inlined_call_operand.vmem [shape: bf16[32,32], index: 6, kind: input, shape index: {}]
  %s7 = inlined_call_operand.vmem [shape: f32[1,32], index: 7, kind: input, shape index: {}]
  %s8 = inlined_call_operand.vmem [shape: f32[1,32], index: 8, kind: input, shape index: {}, may-alias: {2,8}]
  %s9 = inlined_call_operand.vmem [shape: f32[1,32], index: 9, kind: input, shape index: {}, may-alias: {3,9}]
  %s10 = inlined_call_operand.vmem [shape: bf16[32,128], index: 10, kind: input, shape index: {}]
  %s11 = inlined_call_operand.vmem [shape: f32[1,128], index: 11, kind: input, shape index: {}]
  %s12 = inlined_call_operand.vmem [shape: bf16[128,32], index: 12, kind: input, shape index: {}]
  %s13 = inlined_call_operand.vmem [shape: f32[1,32], index: 13, kind: input, shape index: {}]
  %s14 = inlined_call_operand.vmem [shape: bf16[2,24,32], index: 14, kind: output, shape index: {}]
  %s15 = sld [smem:[#allocation0]]
  $region89: #{clip_image_encoder_forward.5} parent=0
    _
  %s17 = ssub.s32 1, %s15
  %s18 = scalar_select 0, %s17, %s15
  loop: start=0, step=1, limit=4
  $region2: #{clip_image_encoder_forward.5} parent=0 // loop_pre_header
    _
  $region3: #{clip_image_encoder_forward.5} parent=0 // loop_header
    %s20 = sphi 0, %s24
    %p21 = scmp.ge.s32.totalorder %s20, 4
    %s30 = sphi 0, %s32
    %s33 = sphi 0, %s30
    %s34 = sphi 0, %s33
    %s50 = sphi 0, %s34
    %s54 = sphi 0, %s54
    %s56 = sphi 0, %s54
    %s57 = sphi 0, %s56
    %s71 = sphi 0, %s57
    %s75 = sphi 0, %s75
    %s77 = sphi 0, %s75
    %s78 = sphi 0, %s77
    %s92 = sphi 0, %s78
    %s96 = sphi 0, %s96
    %s98 = sphi 0, %s96
    %s99 = sphi 0, %s98
    %s113 = sphi 0, %s99
    %s117 = sphi 0, %s117
    %s119 = sphi 0, %s117
    %s120 = sphi 0, %s119
    %s134 = sphi 0, %s120
    %s138 = sphi 0, %s138
    %s140 = sphi 0, %s138
    %s141 = sphi 0, %s140
    %s155 = sphi 0, %s141
    %s159 = sphi 0, %s159
    %s161 = sphi 0, %s159
    %s162 = sphi 0, %s161
    %s176 = sphi 0, %s162
    %s180 = sphi 0, %s180
    %s182 = sphi 0, %s180
    %s183 = sphi 0, %s182
    %s197 = sphi 0, %s183
    %s201 = sphi 0, %s201
    %s203 = sphi 0, %s201
    %s204 = sphi 0, %s203
    %s218 = sphi 0, %s204
    %s222 = sphi 0, %s222
    %s224 = sphi 0, %s222
    %s225 = sphi 0, %s224
    %s239 = sphi 0, %s225
    %s243 = sphi 0, %s243
    %s245 = sphi 0, %s243
    %s246 = sphi 0, %s245
    %s260 = sphi 0, %s246
    %s264 = sphi 0, %s264
    %s266 = sphi 0, %s264
    %s267 = sphi 0, %s266
    %s281 = sphi 0, %s267
    %s285 = sphi 0, %s285
    %s287 = sphi 0, %s285
    %s288 = sphi 0, %s287
    %s302 = sphi 0, %s288
    %s306 = sphi 0, %s306
    %s308 = sphi 0, %s306
    %s309 = sphi 0, %s308
    %s323 = sphi 0, %s309
    %s329 = sphi 0, %s331
    %s332 = sphi 0, %s329
    %s333 = sphi 0, %s332
    %s349 = sphi 0, %s333
  $region4: #{clip_image_encoder_forward.5} parent=0 // loop_header_branch
    %23 = sbr.rel (%p21) target = $region8
  $region5: #{clip_image_encoder_forward.5} parent=0 // loop_body
    %s25 = ssub.s32 %s20, 1
    %s26 = ssub.s32 %s20, 2
    %s27 = sadd.s32 %s20, 1
    %s28 = ssub.s32 %s20, %s27
    %p29 = scmp.eq.s32.totalorder %s28, 0
    %s31 = sadd.s32 %s30, 1
    %s32 = scalar_select %p29, %s30, %s31
    %p35 = pneg %p29
    %p36 = scmp.eq.s32.totalorder %s20, 1
    %p37 = por %p35, %p36
    %p38 = scmp.ne.s32.totalorder %s30, %s33
    %p39 = scmp.eq.s32.totalorder %s20, 0
    %p40 = por %p38, %p39
    %p41 = scmp.ne.s32.totalorder %s30, %s33
    %p42 = scmp.eq.s32.totalorder %s25, 1
    %p43 = por %p41, %p42
    %p44 = scmp.ne.s32.totalorder %s33, %s34
    %p45 = scmp.eq.s32.totalorder %s25, 0
    %p46 = por %p44, %p45
    %p47 = scmp.ne.s32.totalorder %s33, %s34
    %p48 = scmp.eq.s32.totalorder %s26, 1
    %p49 = por %p47, %p48
    %p51 = scmp.ne.s32.totalorder %s34, %s50
    %p52 = scmp.eq.s32.totalorder %s26, 0
    %p53 = por %p51, %p52
    %s55 = sadd.s32 %s54, 1
    %p58 = scmp.eq.s32.totalorder %s20, 1
    %p59 = scmp.ne.s32.totalorder %s54, %s56
    %p60 = scmp.eq.s32.totalorder %s20, 0
    %p61 = por %p59, %p60
    %p62 = scmp.ne.s32.totalorder %s54, %s56
    %p63 = scmp.eq.s32.totalorder %s25, 1
    %p64 = por %p62, %p63
    %p65 = scmp.ne.s32.totalorder %s56, %s57
    %p66 = scmp.eq.s32.totalorder %s25, 0
    %p67 = por %p65, %p66
    %p68 = scmp.ne.s32.totalorder %s56, %s57
    %p69 = scmp.eq.s32.totalorder %s26, 1
    %p70 = por %p68, %p69
    %p72 = scmp.ne.s32.totalorder %s57, %s71
    %p73 = scmp.eq.s32.totalorder %s26, 0
    %p74 = por %p72, %p73
    %s76 = sadd.s32 %s75, 1
    %p79 = scmp.eq.s32.totalorder %s20, 1
    %p80 = scmp.ne.s32.totalorder %s75, %s77
    %p81 = scmp.eq.s32.totalorder %s20, 0
    %p82 = por %p80, %p81
    %p83 = scmp.ne.s32.totalorder %s75, %s77
    %p84 = scmp.eq.s32.totalorder %s25, 1
    %p85 = por %p83, %p84
    %p86 = scmp.ne.s32.totalorder %s77, %s78
    %p87 = scmp.eq.s32.totalorder %s25, 0
    %p88 = por %p86, %p87
    %p89 = scmp.ne.s32.totalorder %s77, %s78
    %p90 = scmp.eq.s32.totalorder %s26, 1
    %p91 = por %p89, %p90
    %p93 = scmp.ne.s32.totalorder %s78, %s92
    %p94 = scmp.eq.s32.totalorder %s26, 0
    %p95 = por %p93, %p94
    %s97 = sadd.s32 %s96, 1
    %p100 = scmp.eq.s32.totalorder %s20, 1
    %p101 = scmp.ne.s32.totalorder %s96, %s98
    %p102 = scmp.eq.s32.totalorder %s20, 0
    %p103 = por %p101, %p102
    %p104 = scmp.ne.s32.totalorder %s96, %s98
    %p105 = scmp.eq.s32.totalorder %s25, 1
    %p106 = por %p104, %p105
    %p107 = scmp.ne.s32.totalorder %s98, %s99
    %p108 = scmp.eq.s32.totalorder %s25, 0
    %p109 = por %p107, %p108
    %p110 = scmp.ne.s32.totalorder %s98, %s99
    %p111 = scmp.eq.s32.totalorder %s26, 1
    %p112 = por %p110, %p111
    %p114 = scmp.ne.s32.totalorder %s99, %s113
    %p115 = scmp.eq.s32.totalorder %s26, 0
    %p116 = por %p114, %p115
    %s118 = sadd.s32 %s117, 1
    %p121 = scmp.eq.s32.totalorder %s20, 1
    %p122 = scmp.ne.s32.totalorder %s117, %s119
    %p123 = scmp.eq.s32.totalorder %s20, 0
    %p124 = por %p122, %p123
    %p125 = scmp.ne.s32.totalorder %s117, %s119
    %p126 = scmp.eq.s32.totalorder %s25, 1
    %p127 = por %p125, %p126
    %p128 = scmp.ne.s32.totalorder %s119, %s120
    %p129 = scmp.eq.s32.totalorder %s25, 0
    %p130 = por %p128, %p129
    %p131 = scmp.ne.s32.totalorder %s119, %s120
    %p132 = scmp.eq.s32.totalorder %s26, 1
    %p133 = por %p131, %p132
    %p135 = scmp.ne.s32.totalorder %s120, %s134
    %p136 = scmp.eq.s32.totalorder %s26, 0
    %p137 = por %p135, %p136
    %s139 = sadd.s32 %s138, 1
    %p142 = scmp.eq.s32.totalorder %s20, 1
    %p143 = scmp.ne.s32.totalorder %s138, %s140
    %p144 = scmp.eq.s32.totalorder %s20, 0
    %p145 = por %p143, %p144
    %p146 = scmp.ne.s32.totalorder %s138, %s140
    %p147 = scmp.eq.s32.totalorder %s25, 1
    %p148 = por %p146, %p147
    %p149 = scmp.ne.s32.totalorder %s140, %s141
    %p150 = scmp.eq.s32.totalorder %s25, 0
    %p151 = por %p149, %p150
    %p152 = scmp.ne.s32.totalorder %s140, %s141
    %p153 = scmp.eq.s32.totalorder %s26, 1
    %p154 = por %p152, %p153
    %p156 = scmp.ne.s32.totalorder %s141, %s155
    %p157 = scmp.eq.s32.totalorder %s26, 0
    %p158 = por %p156, %p157
    %s160 = sadd.s32 %s159, 1
    %p163 = scmp.eq.s32.totalorder %s20, 1
    %p164 = scmp.ne.s32.totalorder %s159, %s161
    %p165 = scmp.eq.s32.totalorder %s20, 0
    %p166 = por %p164, %p165
    %p167 = scmp.ne.s32.totalorder %s159, %s161
    %p168 = scmp.eq.s32.totalorder %s25, 1
    %p169 = por %p167, %p168
    %p170 = scmp.ne.s32.totalorder %s161, %s162
    %p171 = scmp.eq.s32.totalorder %s25, 0
    %p172 = por %p170, %p171
    %p173 = scmp.ne.s32.totalorder %s161, %s162
    %p174 = scmp.eq.s32.totalorder %s26, 1
    %p175 = por %p173, %p174
    %p177 = scmp.ne.s32.totalorder %s162, %s176
    %p178 = scmp.eq.s32.totalorder %s26, 0
    %p179 = por %p177, %p178
    %s181 = sadd.s32 %s180, 1
    %p184 = scmp.eq.s32.totalorder %s20, 1
    %p185 = scmp.ne.s32.totalorder %s180, %s182
    %p186 = scmp.eq.s32.totalorder %s20, 0
    %p187 = por %p185, %p186
    %p188 = scmp.ne.s32.totalorder %s180, %s182
    %p189 = scmp.eq.s32.totalorder %s25, 1
    %p190 = por %p188, %p189
    %p191 = scmp.ne.s32.totalorder %s182, %s183
    %p192 = scmp.eq.s32.totalorder %s25, 0
    %p193 = por %p191, %p192
    %p194 = scmp.ne.s32.totalorder %s182, %s183
    %p195 = scmp.eq.s32.totalorder %s26, 1
    %p196 = por %p194, %p195
    %p198 = scmp.ne.s32.totalorder %s183, %s197
    %p199 = scmp.eq.s32.totalorder %s26, 0
    %p200 = por %p198, %p199
    %s202 = sadd.s32 %s201, 1
    %p205 = scmp.eq.s32.totalorder %s20, 1
    %p206 = scmp.ne.s32.totalorder %s201, %s203
    %p207 = scmp.eq.s32.totalorder %s20, 0
    %p208 = por %p206, %p207
    %p209 = scmp.ne.s32.totalorder %s201, %s203
    %p210 = scmp.eq.s32.totalorder %s25, 1
    %p211 = por %p209, %p210
    %p212 = scmp.ne.s32.totalorder %s203, %s204
    %p213 = scmp.eq.s32.totalorder %s25, 0
    %p214 = por %p212, %p213
    %p215 = scmp.ne.s32.totalorder %s203, %s204
    %p216 = scmp.eq.s32.totalorder %s26, 1
    %p217 = por %p215, %p216
    %p219 = scmp.ne.s32.totalorder %s204, %s218
    %p220 = scmp.eq.s32.totalorder %s26, 0
    %p221 = por %p219, %p220
    %s223 = sadd.s32 %s222, 1
    %p226 = scmp.eq.s32.totalorder %s20, 1
    %p227 = scmp.ne.s32.totalorder %s222, %s224
    %p228 = scmp.eq.s32.totalorder %s20, 0
    %p229 = por %p227, %p228
    %p230 = scmp.ne.s32.totalorder %s222, %s224
    %p231 = scmp.eq.s32.totalorder %s25, 1
    %p232 = por %p230, %p231
    %p233 = scmp.ne.s32.totalorder %s224, %s225
    %p234 = scmp.eq.s32.totalorder %s25, 0
    %p235 = por %p233, %p234
    %p236 = scmp.ne.s32.totalorder %s224, %s225
    %p237 = scmp.eq.s32.totalorder %s26, 1
    %p238 = por %p236, %p237
    %p240 = scmp.ne.s32.totalorder %s225, %s239
    %p241 = scmp.eq.s32.totalorder %s26, 0
    %p242 = por %p240, %p241
    %s244 = sadd.s32 %s243, 1
    %p247 = scmp.eq.s32.totalorder %s20, 1
    %p248 = scmp.ne.s32.totalorder %s243, %s245
    %p249 = scmp.eq.s32.totalorder %s20, 0
    %p250 = por %p248, %p249
    %p251 = scmp.ne.s32.totalorder %s243, %s245
    %p252 = scmp.eq.s32.totalorder %s25, 1
    %p253 = por %p251, %p252
    %p254 = scmp.ne.s32.totalorder %s245, %s246
    %p255 = scmp.eq.s32.totalorder %s25, 0
    %p256 = por %p254, %p255
    %p257 = scmp.ne.s32.totalorder %s245, %s246
    %p258 = scmp.eq.s32.totalorder %s26, 1
    %p259 = por %p257, %p258
    %p261 = scmp.ne.s32.totalorder %s246, %s260
    %p262 = scmp.eq.s32.totalorder %s26, 0
    %p263 = por %p261, %p262
    %s265 = sadd.s32 %s264, 1
    %p268 = scmp.eq.s32.totalorder %s20, 1
    %p269 = scmp.ne.s32.totalorder %s264, %s266
    %p270 = scmp.eq.s32.totalorder %s20, 0
    %p271 = por %p269, %p270
    %p272 = scmp.ne.s32.totalorder %s264, %s266
    %p273 = scmp.eq.s32.totalorder %s25, 1
    %p274 = por %p272, %p273
    %p275 = scmp.ne.s32.totalorder %s266, %s267
    %p276 = scmp.eq.s32.totalorder %s25, 0
    %p277 = por %p275, %p276
    %p278 = scmp.ne.s32.totalorder %s266, %s267
    %p279 = scmp.eq.s32.totalorder %s26, 1
    %p280 = por %p278, %p279
    %p282 = scmp.ne.s32.totalorder %s267, %s281
    %p283 = scmp.eq.s32.totalorder %s26, 0
    %p284 = por %p282, %p283
    %s286 = sadd.s32 %s285, 1
    %p289 = scmp.eq.s32.totalorder %s20, 1
    %p290 = scmp.ne.s32.totalorder %s285, %s287
    %p291 = scmp.eq.s32.totalorder %s20, 0
    %p292 = por %p290, %p291
    %p293 = scmp.ne.s32.totalorder %s285, %s287
    %p294 = scmp.eq.s32.totalorder %s25, 1
    %p295 = por %p293, %p294
    %p296 = scmp.ne.s32.totalorder %s287, %s288
    %p297 = scmp.eq.s32.totalorder %s25, 0
    %p298 = por %p296, %p297
    %p299 = scmp.ne.s32.totalorder %s287, %s288
    %p300 = scmp.eq.s32.totalorder %s26, 1
    %p301 = por %p299, %p300
    %p303 = scmp.ne.s32.totalorder %s288, %s302
    %p304 = scmp.eq.s32.totalorder %s26, 0
    %p305 = por %p303, %p304
    %s307 = sadd.s32 %s306, 1
    %p310 = scmp.eq.s32.totalorder %s20, 1
    %p311 = scmp.ne.s32.totalorder %s306, %s308
    %p312 = scmp.eq.s32.totalorder %s20, 0
    %p313 = por %p311, %p312
    %p314 = scmp.ne.s32.totalorder %s306, %s308
    %p315 = scmp.eq.s32.totalorder %s25, 1
    %p316 = por %p314, %p315
    %p317 = scmp.ne.s32.totalorder %s308, %s309
    %p318 = scmp.eq.s32.totalorder %s25, 0
    %p319 = por %p317, %p318
    %p320 = scmp.ne.s32.totalorder %s308, %s309
    %p321 = scmp.eq.s32.totalorder %s26, 1
    %p322 = por %p320, %p321
    %p324 = scmp.ne.s32.totalorder %s309, %s323
    %p325 = scmp.eq.s32.totalorder %s26, 0
    %p326 = por %p324, %p325
    %s327 = ssub.s32 %s20, %s27
    %p328 = scmp.eq.s32.totalorder %s327, 0
    %s330 = sadd.s32 %s329, 1
    %s331 = scalar_select %p328, %s329, %s330
    %p334 = pneg %p328
    %p335 = scmp.eq.s32.totalorder %s20, 1
    %p336 = por %p334, %p335
    %p337 = scmp.ne.s32.totalorder %s329, %s332
    %p338 = scmp.eq.s32.totalorder %s20, 0
    %p339 = por %p337, %p338
    %p340 = scmp.ne.s32.totalorder %s329, %s332
    %p341 = scmp.eq.s32.totalorder %s25, 1
    %p342 = por %p340, %p341
    %p343 = scmp.ne.s32.totalorder %s332, %s333
    %p344 = scmp.eq.s32.totalorder %s25, 0
    %p345 = por %p343, %p344
    %p346 = scmp.ne.s32.totalorder %s332, %s333
    %p347 = scmp.eq.s32.totalorder %s26, 1
    %p348 = por %p346, %p347
    %p350 = scmp.ne.s32.totalorder %s333, %s349
    %p351 = scmp.eq.s32.totalorder %s26, 0
    %p352 = por %p350, %p351
    %p353 = scmp.le.s32.totalorder 1, %s20
    %p354 = scmp.lt.s32.totalorder %s20, 3
    %p355 = pnand %p353, %p354
    %p356 = pneg %p355
    // Predicated region
    $region9: #{clip_image_encoder_forward.5} parent=5 // pred_check
      _
    $region10: #{clip_image_encoder_forward.5} parent=5 // pred_check_branch
      %358 = sbr.rel (%p355) target = $region12
    $region11: #{clip_image_encoder_forward.5} parent=5 // pred_region
      %s359 = ssub.s32 %s20, 1
      // Predicated region
      $region13: #{clip_image_encoder_forward.5} parent=11 // pred_check
        %p360 = pneg %p67
      $region14: #{clip_image_encoder_forward.5} parent=11 // pred_check_branch
        %362 = sbr.rel (%p360) target = $region16
      $region15: #{clip_image_encoder_forward.5} parent=11 // pred_region
        _
      $region16: #{clip_image_encoder_forward.5} parent=11 // pred_fallthru
        _
      // Predicated region
      $region17: #{clip_image_encoder_forward.5} parent=11 // pred_check
        %p363 = pneg %p88
      $region18: #{clip_image_encoder_forward.5} parent=11 // pred_check_branch
        %365 = sbr.rel (%p363) target = $region20
      $region19: #{clip_image_encoder_forward.5} parent=11 // pred_region
        _
      $region20: #{clip_image_encoder_forward.5} parent=11 // pred_fallthru
        _
      // Predicated region
      $region21: #{clip_image_encoder_forward.5} parent=11 // pred_check
        %p366 = pneg %p109
      $region22: #{clip_image_encoder_forward.5} parent=11 // pred_check_branch
        %368 = sbr.rel (%p366) target = $region24
      $region23: #{clip_image_encoder_forward.5} parent=11 // pred_region
        _
      $region24: #{clip_image_encoder_forward.5} parent=11 // pred_fallthru
        _
      // Predicated region
      $region25: #{clip_image_encoder_forward.5} parent=11 // pred_check
        %p369 = pneg %p130
      $region26: #{clip_image_encoder_forward.5} parent=11 // pred_check_branch
        %371 = sbr.rel (%p369) target = $region28
      $region27: #{clip_image_encoder_forward.5} parent=11 // pred_region
        _
      $region28: #{clip_image_encoder_forward.5} parent=11 // pred_fallthru
        _
      // Predicated region
      $region29: #{clip_image_encoder_forward.5} parent=11 // pred_check
        %p372 = pneg %p151
      $region30: #{clip_image_encoder_forward.5} parent=11 // pred_check_branch
        %374 = sbr.rel (%p372) target = $region32
      $region31: #{clip_image_encoder_forward.5} parent=11 // pred_region
        _
      $region32: #{clip_image_encoder_forward.5} parent=11 // pred_fallthru
        _
      // Predicated region
      $region33: #{clip_image_encoder_forward.5} parent=11 // pred_check
        %p375 = pneg %p172
      $region34: #{clip_image_encoder_forward.5} parent=11 // pred_check_branch
        %377 = sbr.rel (%p375) target = $region36
      $region35: #{clip_image_encoder_forward.5} parent=11 // pred_region
        _
      $region36: #{clip_image_encoder_forward.5} parent=11 // pred_fallthru
        _
      // Predicated region
      $region37: #{clip_image_encoder_forward.5} parent=11 // pred_check
        %p378 = pneg %p193
      $region38: #{clip_image_encoder_forward.5} parent=11 // pred_check_branch
        %380 = sbr.rel (%p378) target = $region40
      $region39: #{clip_image_encoder_forward.5} parent=11 // pred_region
        _
      $region40: #{clip_image_encoder_forward.5} parent=11 // pred_fallthru
        _
      // Predicated region
      $region41: #{clip_image_encoder_forward.5} parent=11 // pred_check
        %p381 = pneg %p214
      $region42: #{clip_image_encoder_forward.5} parent=11 // pred_check_branch
        %383 = sbr.rel (%p381) target = $region44
      $region43: #{clip_image_encoder_forward.5} parent=11 // pred_region
        _
      $region44: #{clip_image_encoder_forward.5} parent=11 // pred_fallthru
        _
      // Predicated region
      $region45: #{clip_image_encoder_forward.5} parent=11 // pred_check
        %p384 = pneg %p235
      $region46: #{clip_image_encoder_forward.5} parent=11 // pred_check_branch
        %386 = sbr.rel (%p384) target = $region48
      $region47: #{clip_image_encoder_forward.5} parent=11 // pred_region
        _
      $region48: #{clip_image_encoder_forward.5} parent=11 // pred_fallthru
        _
      // Predicated region
      $region49: #{clip_image_encoder_forward.5} parent=11 // pred_check
        %p387 = pneg %p256
      $region50: #{clip_image_encoder_forward.5} parent=11 // pred_check_branch
        %389 = sbr.rel (%p387) target = $region52
      $region51: #{clip_image_encoder_forward.5} parent=11 // pred_region
        _
      $region52: #{clip_image_encoder_forward.5} parent=11 // pred_fallthru
        _
      // Predicated region
      $region53: #{clip_image_encoder_forward.5} parent=11 // pred_check
        %p390 = pneg %p277
      $region54: #{clip_image_encoder_forward.5} parent=11 // pred_check_branch
        %392 = sbr.rel (%p390) target = $region56
      $region55: #{clip_image_encoder_forward.5} parent=11 // pred_region
        _
      $region56: #{clip_image_encoder_forward.5} parent=11 // pred_fallthru
        _
      // Predicated region
      $region57: #{clip_image_encoder_forward.5} parent=11 // pred_check
        %p393 = pneg %p298
      $region58: #{clip_image_encoder_forward.5} parent=11 // pred_check_branch
        %395 = sbr.rel (%p393) target = $region60
      $region59: #{clip_image_encoder_forward.5} parent=11 // pred_region
        _
      $region60: #{clip_image_encoder_forward.5} parent=11 // pred_fallthru
        _
      // Predicated region
      $region61: #{clip_image_encoder_forward.5} parent=11 // pred_check
        %p396 = pneg %p319
      $region62: #{clip_image_encoder_forward.5} parent=11 // pred_check_branch
        %398 = sbr.rel (%p396) target = $region64
      $region63: #{clip_image_encoder_forward.5} parent=11 // pred_region
        _
      $region64: #{clip_image_encoder_forward.5} parent=11 // pred_fallthru
        _
    $region12: #{clip_image_encoder_forward.5} parent=5 // pred_fallthru
      _
    %p399 = scmp.lt.s32.totalorder %s20, 2
    // Predicated region
    $region65: #{clip_image_encoder_forward.5} parent=5 // pred_check
      %p400 = pneg %p399
    $region66: #{clip_image_encoder_forward.5} parent=5 // pred_check_branch
      %402 = sbr.rel (%p400) target = $region68
    $region67: #{clip_image_encoder_forward.5} parent=5 // pred_region
      // Predicated region
      $region69: #{clip_image_encoder_forward.5} parent=67 // pred_check
        %p403 = pneg %p40
      $region70: #{clip_image_encoder_forward.5} parent=67 // pred_check_branch
        %405 = sbr.rel (%p403) target = $region72
      $region71: #{clip_image_encoder_forward.5} parent=67 // pred_region
        %p406 = scmp.lt.s32.totalorder %s20, 1
        %s407 = scalar_select %p406, %s20, 1
        %s408 = smul.addr %s407, 3
        %s409 = smul.addr %s408, 4
        %s410 = scalar_lea.vmem %s0, %s409
      $region72: #{clip_image_encoder_forward.5} parent=67 // pred_fallthru
        _
    $region68: #{clip_image_encoder_forward.5} parent=5 // pred_fallthru
      _
    %p411 = scmp.le.s32.totalorder 1, %s20
    %p412 = scmp.lt.s32.totalorder %s20, 3
    %p413 = pnand %p411, %p412
    %p414 = pneg %p413
    // Predicated region
    $region73: #{clip_image_encoder_forward.5} parent=5 // pred_check
      _
    $region74: #{clip_image_encoder_forward.5} parent=5 // pred_check_branch
      %416 = sbr.rel (%p413) target = $region76
    $region75: #{clip_image_encoder_forward.5} parent=5 // pred_region
      %s417 = ssub.s32 %s20, 1
      %p418 = scmp.lt.s32.totalorder %s25, 1
      %s419 = scalar_select %p418, %s25, 1
      %s420 = smul.addr %s419, 3
      %s421 = smul.addr %s420, 4
      %s422 = scalar_lea.vmem %s0, %s421
      %p423 = pneg %p46
      %p424 = pneg %p43
      %p425 = pneg %p67
      %p426 = pneg %p64
      %p427 = pneg %p88
      %p428 = pneg %p85
      %p429 = pneg %p109
      %p430 = pneg %p106
      %p431 = pneg %p130
      %p432 = pneg %p127
      %p433 = pneg %p151
      %p434 = pneg %p148
      %p435 = pneg %p172
      %p436 = pneg %p169
      %p437 = pneg %p193
      %p438 = pneg %p190
      %p439 = pneg %p214
      %p440 = pneg %p211
      %p441 = pneg %p235
      %p442 = pneg %p232
      %p443 = pneg %p256
      %p444 = pneg %p253
      %p445 = pneg %p277
      %p446 = pneg %p274
      %p447 = pneg %p298
      %p448 = pneg %p295
      %p449 = pneg %p319
      %p450 = pneg %p316
      %p451 = pneg %p345
      %p452 = pneg %p342
      %p453 = scmp.lt.s32.totalorder %s25, 1
      %s454 = scalar_select %p453, %s25, 1
      %s455 = smul.addr %s454, 3
      %s456 = smul.addr %s455, 4
      %s457 = scalar_lea.vmem %s14, %s456
      %p458 = scmp.lt.s32.totalorder %s25, 1
      %s459 = scalar_select %p458, %s25, 1
      %s460 = smul.addr %s459, 3
      %s461 = smul.addr %s460, 4
      %s462 = scalar_lea.vmem %s0, %s461
      %p463 = scmp.lt.s32.totalorder %s25, 1
      %s464 = scalar_select %p463, %s25, 1
      %s465 = smul.addr %s464, 3
      %s466 = smul.addr %s465, 4
      %s467 = scalar_lea.vmem %s14, %s466
      %v469 = vld [vmem:[%s462] sm:$0xf]
      %v470 = vld [vmem:[%s462 + $0x4] sm:$0xf]
      %v471 = vld [vmem:[%s462 + $0x8] sm:$0xf]
      %v472 = vunpack.c.l.bf16 %v469
      %v473 = vunpack.c.l.bf16 %v470
      %v474 = vunpack.c.l.bf16 %v471
      %v475 = vld [vmem:[%s2] sm:$0x1]
      %v476 = vld [vmem:[%s3] sm:$0x1]
      %vm477 = vcmask 261120
      %v478 = vsel %vm477, %v472, 0.0
      %479 = vadd.xlane.f32.xlu0 %v478
      %v480 = vpop.xlane.xlu0 %479
      %v481 = vsel %vm477, %v473, 0.0
      %482 = vadd.xlane.f32.xlu0 %v481
      %v483 = vpop.xlane.xlu0 %482
      %v484 = vsel %vm477, %v474, 0.0
      %485 = vadd.xlane.f32.xlu0 %v484
      %v486 = vpop.xlane.xlu0 %485
      %v487 = vrcp.pop 32.0
      %v488 = vmul.f32 32.0, %v487
      %v489 = vsub.f32 1.0, %v488
      %v490 = vmul.f32 %v487, %v489
      %v491 = vadd.f32 %v487, %v490
      %vm492 = vweird.f32 %v487
      %v493 = vsel %vm492, %v487, %v491
      %v494 = vmul.f32 %v480, %v493
      %v495 = vmul.f32 %v483, %v493
      %v496 = vmul.f32 %v486, %v493
      %v497 = vsub.f32 %v472, %v494
      %v498 = vsub.f32 %v473, %v495
      %v499 = vsub.f32 %v474, %v496
      %v500 = vmul.f32 %v497, %v497
      %v501 = vmul.f32 %v498, %v498
      %v502 = vmul.f32 %v499, %v499
      %v503 = vsel %vm477, %v500, 0.0
      %504 = vadd.xlane.f32.xlu0 %v503
      %v505 = vpop.xlane.xlu0 %504
      %v506 = vsel %vm477, %v501, 0.0
      %507 = vadd.xlane.f32.xlu0 %v506
      %v508 = vpop.xlane.xlu0 %507
      %v509 = vsel %vm477, %v502, 0.0
      %510 = vadd.xlane.f32.xlu0 %v509
      %v511 = vpop.xlane.xlu0 %510
      %v512 = vmul.f32 %v505, %v493
      %v513 = vmul.f32 %v508, %v493
      %v514 = vmul.f32 %v511, %v493
      %v515 = vadd.f32 %v512, 1e-05
      %v516 = vadd.f32 %v513, 1e-05
      %v517 = vadd.f32 %v514, 1e-05
      %v518 = vrsqrt.pop %v515
      %v519 = vmul.f32 %v518, %v515
      %v520 = vmul.f32 %v519, %v518
      %v521 = vmul.f32 0.5, %v520
      %v522 = vsub.f32 1.5, %v521
      %v523 = vmul.f32 %v518, %v522
      %vm524 = vweird.f32 %v515
      %vm525 = vweird.f32 %v518
      %vm526 = vmor %vm524, %vm525
      %v527 = vsel %vm526, %v518, %v523
      %v528 = vrsqrt.pop %v516
      %v529 = vmul.f32 %v528, %v516
      %v530 = vmul.f32 %v529, %v528
      %v531 = vmul.f32 0.5, %v530
      %v532 = vsub.f32 1.5, %v531
      %v533 = vmul.f32 %v528, %v532
      %vm534 = vweird.f32 %v516
      %vm535 = vweird.f32 %v528
      %vm536 = vmor %vm534, %vm535
      %v537 = vsel %vm536, %v528, %v533
      %v538 = vrsqrt.pop %v517
      %v539 = vmul.f32 %v538, %v517
      %v540 = vmul.f32 %v539, %v538
      %v541 = vmul.f32 0.5, %v540
      %v542 = vsub.f32 1.5, %v541
      %v543 = vmul.f32 %v538, %v542
      %vm544 = vweird.f32 %v517
      %vm545 = vweird.f32 %v538
      %vm546 = vmor %vm544, %vm545
      %v547 = vsel %vm546, %v538, %v543
      %v548 = vmul.f32 %v497, %v527
      %v549 = vmul.f32 %v498, %v537
      %v550 = vmul.f32 %v499, %v547
      %v552 = vperm.slane %v475, 0
      %v554 = vmul.f32 %v548, %v552
      %v555 = vmul.f32 %v549, %v552
      %v556 = vmul.f32 %v550, %v552
      %v558 = vperm.slane %v476, 0
      %v560 = vadd.f32 %v554, %v558
      %v561 = vadd.f32 %v555, %v558
      %v562 = vadd.f32 %v556, %v558
      %v563 = vld [vmem:[%s4] sm:$0xf]
      %v564 = vld [vmem:[%s4 + $0x4] sm:$0xf]
      %v565 = vld [vmem:[%s4 + $0x8] sm:$0xf]
      %v566 = vld [vmem:[%s4 + $0xc] sm:$0xf]
      %v567 = vpack.c.bf16 %v561, %v560
      %v568 = vpack.c.bf16 %v562, %v562
      %v569 = vld [vmem:[%s5] sm:$0x1]
      %v571 = vperm.slane %v569, 0
      %v577 = vunpack.c.l.b16 %v563
      %v578 = vunpack.c.l.b16 %v564
      %v579 = vunpack.c.l.b16 %v565
      %v580 = vunpack.c.l.b16 %v566
      %v581 = vpack.c.b16 %v578, %v577
      %v582 = vpack.c.b16 %v580, %v579
      %v586 = vsel %vm477, %v567, 0
      %v589 = vsel %vm477, %v568, 0
      %591 = vmatpush.bf16.msra.mxu0 0
      %592 = vmatpush.bf16.msra.mxu0 0
      %593 = vmatpush.bf16.msra.mxu0 0
      %594 = vmatpush.bf16.msra.mxu0 0
      %595 = vmatpush.bf16.msra.mxu0 0
      %596 = vmatpush.bf16.msra.mxu0 0
      %597 = vmatpush.bf16.msra.mxu0 %v582
      %598 = vmatpush.bf16.msra.mxu0 %v581
      %599 = vmatmul.bf16.gmra.mxu0 %v586
      %v600 = vpop.f32.mrf.mxu0
      %v601 = vadd.f32 %v571, %v600
      %v602 = vpop.f32.mrf.mxu0
      %v603 = vadd.f32 %v571, %v602
      %604 = vmatmul.bf16.gmra.mxu0 %v589
      %v605 = vpop.f32.mrf.mxu0
      %v606 = vadd.f32 %v571, %v605
      %v607 = vpop.f32.mrf.mxu0
      %608 = vdwg.mxu0
      %v609 = vld [vmem:[%s1] sm:$0x1]
      %v610 = vpack.c.bf16 %v603, %v601
      %v611 = vpack.c.bf16 %v606, %v606
      %v613 = vperm.slane %v609, 0
      %617 = vrot.lane.b32.xlu0 %v610, 96
      %v618 = vpop.permute.xlu0 %617
      %619 = vrot.lane.b32.xlu0 %v611, 96
      %v620 = vpop.permute.xlu0 %619
      %vm621 = vcmask 130048
      %v623 = vsel %vm621, %v610, 0
      %v626 = vsel %vm621, %v611, 0
      %v629 = vsel %vm621, %v618, 0
      %v632 = vsel %vm621, %v620, 0
      %634 = vmatpush.bf16.xpose.msra.mxu0 0
      %635 = vmatpush.bf16.xpose.msra.mxu0 0
      %636 = vmatpush.bf16.xpose.msra.mxu0 0
      %637 = vmatpush.bf16.xpose.msra.mxu0 0
      %638 = vmatpush.bf16.xpose.msra.mxu0 0
      %639 = vmatpush.bf16.xpose.msra.mxu0 0
      %640 = vmatpush.bf16.xpose.msra.mxu0 %v632
      %641 = vmatpush.bf16.xpose.msra.mxu0 %v629
      %642 = vmatmul.bf16.gmra.mxu0 %v623
      %v643 = vpop.f32.mrf.mxu0
      %v644 = vadd.f32 %v613, %v643
      %v645 = vpop.f32.mrf.mxu0
      %v646 = vadd.f32 %v613, %v645
      %647 = vmatmul.bf16.gmra.mxu0 %v626
      %v648 = vpop.f32.mrf.mxu0
      %v649 = vadd.f32 %v613, %v648
      %v650 = vpop.f32.mrf.mxu0
      %651 = vdwg.mxu0
      %vm652 = vcmask 195584
      %v653 = vsel %vm652, %v644, -inf
      %654 = vmax.xlane.f32.xlu0 %v653
      %v655 = vpop.xlane.xlu0 %654
      %v656 = vsel %vm652, %v646, -inf
      %657 = vmax.xlane.f32.xlu0 %v656
      %v658 = vpop.xlane.xlu0 %657
      %v659 = vsel %vm652, %v649, -inf
      %660 = vmax.xlane.f32.xlu0 %v659
      %v661 = vpop.xlane.xlu0 %660
      %v662 = vsub.f32 %v644, %v655
      %v663 = vsub.f32 %v646, %v658
      %v664 = vsub.f32 %v649, %v661
      %v665 = vmul.f32 %v662, 1.442695
      %v666 = vpow.pop %v665
      %v667 = vmul.f32 %v663, 1.442695
      %v668 = vpow.pop %v667
      %v669 = vmul.f32 %v664, 1.442695
      %v670 = vpow.pop %v669
      %v671 = vsel %vm652, %v666, 0.0
      %672 = vadd.xlane.f32.xlu0 %v671
      %v673 = vpop.xlane.xlu0 %672
      %v674 = vsel %vm652, %v668, 0.0
      %675 = vadd.xlane.f32.xlu0 %v674
      %v676 = vpop.xlane.xlu0 %675
      %v677 = vsel %vm652, %v670, 0.0
      %678 = vadd.xlane.f32.xlu0 %v677
      %v679 = vpop.xlane.xlu0 %678
      %v680 = vrcp.pop %v673
      %v681 = vrcp.pop %v676
      %v682 = vrcp.pop %v679
      %v683 = vmul.f32 %v666, %v680
      %v684 = vmul.f32 %v668, %v681
      %v685 = vmul.f32 %v670, %v682
      %v686 = vpack.c.bf16 %v684, %v683
      %v687 = vpack.c.bf16 %v685, %v685
      %688 = vrot.lane.b32.xlu0 %v610, 64
      %v689 = vpop.permute.xlu0 %688
      %690 = vrot.lane.b32.xlu0 %v611, 64
      %v691 = vpop.permute.xlu0 %690
      %v694 = vsel %vm652, %v686, 0
      %v697 = vsel %vm652, %v687, 0
      %vm699 = vcmask 1043456
      %v701 = vsel %vm699, %v691, 0
      %703 = vmatpush.bf16.msra.mxu0 0
      %704 = vmatpush.bf16.msra.mxu0 0
      %705 = vmatpush.bf16.msra.mxu0 0
      %706 = vmatpush.bf16.msra.mxu0 0
      %707 = vmatpush.bf16.msra.mxu0 0
      %708 = vmatpush.bf16.msra.mxu0 0
      %709 = vmatpush.bf16.msra.mxu0 %v701
      %710 = vmatpush.bf16.msra.mxu0 %v689
      %711 = vmatmul.bf16.gmra.mxu0 %v694
      %v712 = vpop.f32.mrf.mxu0
      %v713 = vadd.f32 0.0, %v712
      %v714 = vpop.f32.mrf.mxu0
      %v715 = vadd.f32 0.0, %v714
      %716 = vmatmul.bf16.gmra.mxu0 %v697
      %v717 = vpop.f32.mrf.mxu0
      %v718 = vadd.f32 0.0, %v717
      %v719 = vpop.f32.mrf.mxu0
      %720 = vdwg.mxu0
      %721 = vrot.lane.b32.xlu0 %v610, 112
      %v722 = vpop.permute.xlu0 %721
      %723 = vrot.lane.b32.xlu0 %v611, 112
      %v724 = vpop.permute.xlu0 %723
      %725 = vrot.lane.b32.xlu0 %v610, 80
      %v726 = vpop.permute.xlu0 %725
      %727 = vrot.lane.b32.xlu0 %v611, 80
      %v728 = vpop.permute.xlu0 %727
      %v730 = vsel %vm621, %v722, 0
      %v733 = vsel %vm621, %v724, 0
      %v736 = vsel %vm621, %v726, 0
      %v739 = vsel %vm621, %v728, 0
      %741 = vmatpush.bf16.xpose.msra.mxu0 0
      %742 = vmatpush.bf16.xpose.msra.mxu0 0
      %743 = vmatpush.bf16.xpose.msra.mxu0 0
      %744 = vmatpush.bf16.xpose.msra.mxu0 0
      %745 = vmatpush.bf16.xpose.msra.mxu0 0
      %746 = vmatpush.bf16.xpose.msra.mxu0 0
      %747 = vmatpush.bf16.xpose.msra.mxu0 %v739
      %748 = vmatpush.bf16.xpose.msra.mxu0 %v736
      %749 = vmatmul.bf16.gmra.mxu0 %v730
      %v750 = vpop.f32.mrf.mxu0
      %v751 = vadd.f32 %v613, %v750
      %v752 = vpop.f32.mrf.mxu0
      %v753 = vadd.f32 %v613, %v752
      %754 = vmatmul.bf16.gmra.mxu0 %v733
      %v755 = vpop.f32.mrf.mxu0
      %v756 = vadd.f32 %v613, %v755
      %v757 = vpop.f32.mrf.mxu0
      %758 = vdwg.mxu0
      %v759 = vsel %vm652, %v751, -inf
      %760 = vmax.xlane.f32.xlu0 %v759
      %v761 = vpop.xlane.xlu0 %760
      %v762 = vsel %vm652, %v753, -inf
      %763 = vmax.xlane.f32.xlu0 %v762
      %v764 = vpop.xlane.xlu0 %763
      %v765 = vsel %vm652, %v756, -inf
      %766 = vmax.xlane.f32.xlu0 %v765
      %v767 = vpop.xlane.xlu0 %766
      %v768 = vsub.f32 %v751, %v761
      %v769 = vsub.f32 %v753, %v764
      %v770 = vsub.f32 %v756, %v767
      %v771 = vmul.f32 %v768, 1.442695
      %v772 = vpow.pop %v771
      %v773 = vmul.f32 %v769, 1.442695
      %v774 = vpow.pop %v773
      %v775 = vmul.f32 %v770, 1.442695
      %v776 = vpow.pop %v775
      %v777 = vsel %vm652, %v772, 0.0
      %778 = vadd.xlane.f32.xlu0 %v777
      %v779 = vpop.xlane.xlu0 %778
      %v780 = vsel %vm652, %v774, 0.0
      %781 = vadd.xlane.f32.xlu0 %v780
      %v782 = vpop.xlane.xlu0 %781
      %v783 = vsel %vm652, %v776, 0.0
      %784 = vadd.xlane.f32.xlu0 %v783
      %v785 = vpop.xlane.xlu0 %784
      %v786 = vrcp.pop %v779
      %v787 = vrcp.pop %v782
      %v788 = vrcp.pop %v785
      %v789 = vmul.f32 %v772, %v786
      %v790 = vmul.f32 %v774, %v787
      %v791 = vmul.f32 %v776, %v788
      %v792 = vpack.c.bf16 %v790, %v789
      %v793 = vpack.c.bf16 %v791, %v791
      %794 = vrot.lane.b32.xlu0 %v610, 48
      %v795 = vpop.permute.xlu0 %794
      %796 = vrot.lane.b32.xlu0 %v611, 48
      %v797 = vpop.permute.xlu0 %796
      %v800 = vsel %vm652, %v792, 0
      %v803 = vsel %vm652, %v793, 0
      %v806 = vsel %vm699, %v797, 0
      %808 = vmatpush.bf16.msra.mxu0 0
      %809 = vmatpush.bf16.msra.mxu0 0
      %810 = vmatpush.bf16.msra.mxu0 0
      %811 = vmatpush.bf16.msra.mxu0 0
      %812 = vmatpush.bf16.msra.mxu0 0
      %813 = vmatpush.bf16.msra.mxu0 0
      %814 = vmatpush.bf16.msra.mxu0 %v806
      %815 = vmatpush.bf16.msra.mxu0 %v795
      %816 = vmatmul.bf16.gmra.mxu0 %v800
      %v817 = vpop.f32.mrf.mxu0
      %v818 = vadd.f32 0.0, %v817
      %v819 = vpop.f32.mrf.mxu0
      %v820 = vadd.f32 0.0, %v819
      %821 = vmatmul.bf16.gmra.mxu0 %v803
      %v822 = vpop.f32.mrf.mxu0
      %v823 = vadd.f32 0.0, %v822
      %v824 = vpop.f32.mrf.mxu0
      %825 = vdwg.mxu0
      %829 = vrot.lane.b32.xlu0 %v818, 16
      %v830 = vpop.permute.xlu0 %829
      %831 = vrot.lane.b32.xlu0 %v820, 16
      %v832 = vpop.permute.xlu0 %831
      %833 = vrot.lane.b32.xlu0 %v823, 16
      %v834 = vpop.permute.xlu0 %833
      %v838 = vsel %vm621, %v713, %v830
      %v839 = vsel %vm621, %v715, %v832
      %v840 = vsel %vm621, %v718, %v834
      %v841 = vld [vmem:[%s6] sm:$0xf]
      %v842 = vld [vmem:[%s6 + $0x4] sm:$0xf]
      %v843 = vld [vmem:[%s6 + $0x8] sm:$0xf]
      %v844 = vld [vmem:[%s6 + $0xc] sm:$0xf]
      %v845 = vpack.c.bf16 %v839, %v838
      %v846 = vpack.c.bf16 %v840, %v840
      %v851 = vunpack.c.l.b16 %v841
      %v852 = vunpack.c.l.b16 %v842
      %v853 = vunpack.c.l.b16 %v843
      %v854 = vunpack.c.l.b16 %v844
      %v855 = vpack.c.b16 %v852, %v851
      %v856 = vpack.c.b16 %v854, %v853
      %v860 = vsel %vm477, %v845, 0
      %v863 = vsel %vm477, %v846, 0
      %865 = vmatpush.bf16.msra.mxu0 0
      %866 = vmatpush.bf16.msra.mxu0 0
      %867 = vmatpush.bf16.msra.mxu0 0
      %868 = vmatpush.bf16.msra.mxu0 0
      %869 = vmatpush.bf16.msra.mxu0 0
      %870 = vmatpush.bf16.msra.mxu0 0
      %871 = vmatpush.bf16.msra.mxu0 %v856
      %872 = vmatpush.bf16.msra.mxu0 %v855
      %873 = vmatmul.bf16.gmra.mxu0 %v860
      %v874 = vpop.f32.mrf.mxu0
      %v875 = vadd.f32 0.0, %v874
      %v876 = vpop.f32.mrf.mxu0
      %v877 = vadd.f32 0.0, %v876
      %878 = vmatmul.bf16.gmra.mxu0 %v863
      %v879 = vpop.f32.mrf.mxu0
      %v880 = vadd.f32 0.0, %v879
      %v881 = vpop.f32.mrf.mxu0
      %882 = vdwg.mxu0
      %v883 = vadd.f32 %v472, %v875
      %v884 = vadd.f32 %v473, %v877
      %v885 = vadd.f32 %v474, %v880
      %v886 = vld [vmem:[%s7] sm:$0x1]
      %v888 = vperm.slane %v886, 0
      %v890 = vadd.f32 %v883, %v888
      %v891 = vadd.f32 %v884, %v888
      %v892 = vadd.f32 %v885, %v888
      %v893 = vld [vmem:[%s8] sm:$0x1]
      %v894 = vld [vmem:[%s9] sm:$0x1]
      %v895 = vsel %vm477, %v890, 0.0
      %896 = vadd.xlane.f32.xlu0 %v895
      %v897 = vpop.xlane.xlu0 %896
      %v898 = vsel %vm477, %v891, 0.0
      %899 = vadd.xlane.f32.xlu0 %v898
      %v900 = vpop.xlane.xlu0 %899
      %v901 = vsel %vm477, %v892, 0.0
      %902 = vadd.xlane.f32.xlu0 %v901
      %v903 = vpop.xlane.xlu0 %902
      %v904 = vmul.f32 %v897, %v493
      %v905 = vmul.f32 %v900, %v493
      %v906 = vmul.f32 %v903, %v493
      %v907 = vsub.f32 %v890, %v904
      %v908 = vsub.f32 %v891, %v905
      %v909 = vsub.f32 %v892, %v906
      %v910 = vmul.f32 %v907, %v907
      %v911 = vmul.f32 %v908, %v908
      %v912 = vmul.f32 %v909, %v909
      %v913 = vsel %vm477, %v910, 0.0
      %914 = vadd.xlane.f32.xlu0 %v913
      %v915 = vpop.xlane.xlu0 %914
      %v916 = vsel %vm477, %v911, 0.0
      %917 = vadd.xlane.f32.xlu0 %v916
      %v918 = vpop.xlane.xlu0 %917
      %v919 = vsel %vm477, %v912, 0.0
      %920 = vadd.xlane.f32.xlu0 %v919
      %v921 = vpop.xlane.xlu0 %920
      %v922 = vmul.f32 %v915, %v493
      %v923 = vmul.f32 %v918, %v493
      %v924 = vmul.f32 %v921, %v493
      %v925 = vadd.f32 %v922, 1e-05
      %v926 = vadd.f32 %v923, 1e-05
      %v927 = vadd.f32 %v924, 1e-05
      %v928 = vrsqrt.pop %v925
      %v929 = vmul.f32 %v928, %v925
      %v930 = vmul.f32 %v929, %v928
      %v931 = vmul.f32 0.5, %v930
      %v932 = vsub.f32 1.5, %v931
      %v933 = vmul.f32 %v928, %v932
      %vm934 = vweird.f32 %v925
      %vm935 = vweird.f32 %v928
      %vm936 = vmor %vm934, %vm935
      %v937 = vsel %vm936, %v928, %v933
      %v938 = vrsqrt.pop %v926
      %v939 = vmul.f32 %v938, %v926
      %v940 = vmul.f32 %v939, %v938
      %v941 = vmul.f32 0.5, %v940
      %v942 = vsub.f32 1.5, %v941
      %v943 = vmul.f32 %v938, %v942
      %vm944 = vweird.f32 %v926
      %vm945 = vweird.f32 %v938
      %vm946 = vmor %vm944, %vm945
      %v947 = vsel %vm946, %v938, %v943
      %v948 = vrsqrt.pop %v927
      %v949 = vmul.f32 %v948, %v927
      %v950 = vmul.f32 %v949, %v948
      %v951 = vmul.f32 0.5, %v950
      %v952 = vsub.f32 1.5, %v951
      %v953 = vmul.f32 %v948, %v952
      %vm954 = vweird.f32 %v927
      %vm955 = vweird.f32 %v948
      %vm956 = vmor %vm954, %vm955
      %v957 = vsel %vm956, %v948, %v953
      %v958 = vmul.f32 %v907, %v937
      %v959 = vmul.f32 %v908, %v947
      %v960 = vmul.f32 %v909, %v957
      %v962 = vperm.slane %v893, 0
      %v964 = vmul.f32 %v958, %v962
      %v965 = vmul.f32 %v959, %v962
      %v966 = vmul.f32 %v960, %v962
      %v968 = vperm.slane %v894, 0
      %v970 = vadd.f32 %v964, %v968
      %v971 = vadd.f32 %v965, %v968
      %v972 = vadd.f32 %v966, %v968
      %v973 = vld [vmem:[%s10] sm:$0xf]
      %v974 = vld [vmem:[%s10 + $0x4] sm:$0xf]
      %v975 = vld [vmem:[%s10 + $0x8] sm:$0xf]
      %v976 = vld [vmem:[%s10 + $0xc] sm:$0xf]
      %v977 = vpack.c.bf16 %v971, %v970
      %v978 = vpack.c.bf16 %v972, %v972
      %v979 = vld [vmem:[%s11] sm:$0x1]
      %v981 = vperm.slane %v979, 0
      %v987 = vunpack.c.l.b16 %v973
      %v988 = vunpack.c.l.b16 %v974
      %v989 = vunpack.c.l.b16 %v975
      %v990 = vunpack.c.l.b16 %v976
      %v991 = vpack.c.b16 %v988, %v987
      %v992 = vpack.c.b16 %v990, %v989
      %v996 = vsel %vm477, %v977, 0
      %v999 = vsel %vm477, %v978, 0
      %1001 = vmatpush.bf16.msra.mxu0 0
      %1002 = vmatpush.bf16.msra.mxu0 0
      %1003 = vmatpush.bf16.msra.mxu0 0
      %1004 = vmatpush.bf16.msra.mxu0 0
      %1005 = vmatpush.bf16.msra.mxu0 0
      %1006 = vmatpush.bf16.msra.mxu0 0
      %1007 = vmatpush.bf16.msra.mxu0 %v992
      %1008 = vmatpush.bf16.msra.mxu0 %v991
      %1009 = vmatmul.bf16.gmra.mxu0 %v996
      %v1010 = vpop.f32.mrf.mxu0
      %v1011 = vadd.f32 %v981, %v1010
      %v1012 = vpop.f32.mrf.mxu0
      %v1013 = vadd.f32 %v981, %v1012
      %1014 = vmatmul.bf16.gmra.mxu0 %v999
      %v1015 = vpop.f32.mrf.mxu0
      %v1016 = vadd.f32 %v981, %v1015
      %v1017 = vpop.f32.mrf.mxu0
      %1018 = vdwg.mxu0
      %v1019 = vmul.f32 %v1011, 1.702
      %v1020 = vmul.f32 %v1013, 1.702
      %v1021 = vmul.f32 %v1016, 1.702
      %v1022 = vxor.u32 %v1019, 2147483648
      %v1023 = vxor.u32 %v1020, 2147483648
      %v1024 = vxor.u32 %v1021, 2147483648
      %v1025 = vmul.f32 %v1022, 1.442695
      %v1026 = vpow.pop %v1025
      %v1027 = vmul.f32 %v1023, 1.442695
      %v1028 = vpow.pop %v1027
      %v1029 = vmul.f32 %v1024, 1.442695
      %v1030 = vpow.pop %v1029
      %v1031 = vadd.f32 %v1026, 1.0
      %v1032 = vadd.f32 %v1028, 1.0
      %v1033 = vadd.f32 %v1030, 1.0
      %v1034 = vrcp.pop %v1031
      %v1035 = vmul.f32 %v1031, %v1034
      %v1036 = vsub.f32 1.0, %v1035
      %v1037 = vmul.f32 %v1034, %v1036
      %v1038 = vadd.f32 %v1034, %v1037
      %vm1039 = vweird.f32 %v1031
      %vm1040 = vweird.f32 %v1034
      %vm1041 = vmor %vm1039, %vm1040
      %v1042 = vsel %vm1041, %v1034, %v1038
      %v1043 = vand.u32 2147483647, %v1031
      %vm1044 = vcmp.eq.f32.partialorder %v1043, 8.507059e+37
      %v1045 = vand.u32 %v1031, 2147483648
      %v1046 = vor.u32 1.1754944e-38, %v1045
      %v1047 = vsel %vm1044, %v1046, %v1042
      %v1048 = vmul.f32 1.0, %v1047
      %v1049 = vrcp.pop %v1032
      %v1050 = vmul.f32 %v1032, %v1049
      %v1051 = vsub.f32 1.0, %v1050
      %v1052 = vmul.f32 %v1049, %v1051
      %v1053 = vadd.f32 %v1049, %v1052
      %vm1054 = vweird.f32 %v1032
      %vm1055 = vweird.f32 %v1049
      %vm1056 = vmor %vm1054, %vm1055
      %v1057 = vsel %vm1056, %v1049, %v1053
      %v1058 = vand.u32 2147483647, %v1032
      %vm1059 = vcmp.eq.f32.partialorder %v1058, 8.507059e+37
      %v1060 = vand.u32 %v1032, 2147483648
      %v1061 = vor.u32 1.1754944e-38, %v1060
      %v1062 = vsel %vm1059, %v1061, %v1057
      %v1063 = vmul.f32 1.0, %v1062
      %v1064 = vrcp.pop %v1033
      %v1065 = vmul.f32 %v1033, %v1064
      %v1066 = vsub.f32 1.0, %v1065
      %v1067 = vmul.f32 %v1064, %v1066
      %v1068 = vadd.f32 %v1064, %v1067
      %vm1069 = vweird.f32 %v1033
      %vm1070 = vweird.f32 %v1064
      %vm1071 = vmor %vm1069, %vm1070
      %v1072 = vsel %vm1071, %v1064, %v1068
      %v1073 = vand.u32 2147483647, %v1033
      %vm1074 = vcmp.eq.f32.partialorder %v1073, 8.507059e+37
      %v1075 = vand.u32 %v1033, 2147483648
      %v1076 = vor.u32 1.1754944e-38, %v1075
      %v1077 = vsel %vm1074, %v1076, %v1072
      %v1078 = vmul.f32 1.0, %v1077
      %v1079 = vmul.f32 %v1011, %v1048
      %v1080 = vmul.f32 %v1013, %v1063
      %v1081 = vmul.f32 %v1016, %v1078
      %v1082 = vld [vmem:[%s12] sm:$0xf]
      %v1083 = vld [vmem:[%s12 + $0x4] sm:$0xf]
      %v1084 = vld [vmem:[%s12 + $0x8] sm:$0xf]
      %v1085 = vld [vmem:[%s12 + $0xc] sm:$0xf]
      %v1086 = vld [vmem:[%s12 + $0x10] sm:$0xf]
      %v1087 = vld [vmem:[%s12 + $0x14] sm:$0xf]
      %v1088 = vld [vmem:[%s12 + $0x18] sm:$0xf]
      %v1089 = vld [vmem:[%s12 + $0x1c] sm:$0xf]
      %v1090 = vld [vmem:[%s12 + $0x20] sm:$0xf]
      %v1091 = vld [vmem:[%s12 + $0x24] sm:$0xf]
      %v1092 = vld [vmem:[%s12 + $0x28] sm:$0xf]
      %v1093 = vld [vmem:[%s12 + $0x2c] sm:$0xf]
      %v1094 = vld [vmem:[%s12 + $0x30] sm:$0xf]
      %v1095 = vld [vmem:[%s12 + $0x34] sm:$0xf]
      %v1096 = vld [vmem:[%s12 + $0x38] sm:$0xf]
      %v1097 = vld [vmem:[%s12 + $0x3c] sm:$0xf]
      %v1098 = vpack.c.bf16 %v1080, %v1079
      %v1099 = vpack.c.bf16 %v1081, %v1081
      %v1116 = vunpack.c.l.b16 %v1082
      %v1117 = vunpack.c.l.b16 %v1083
      %v1118 = vunpack.c.l.b16 %v1084
      %v1119 = vunpack.c.l.b16 %v1085
      %v1120 = vunpack.c.l.b16 %v1086
      %v1121 = vunpack.c.l.b16 %v1087
      %v1122 = vunpack.c.l.b16 %v1088
      %v1123 = vunpack.c.l.b16 %v1089
      %v1124 = vunpack.c.l.b16 %v1090
      %v1125 = vunpack.c.l.b16 %v1091
      %v1126 = vunpack.c.l.b16 %v1092
      %v1127 = vunpack.c.l.b16 %v1093
      %v1128 = vunpack.c.l.b16 %v1094
      %v1129 = vunpack.c.l.b16 %v1095
      %v1130 = vunpack.c.l.b16 %v1096
      %v1131 = vunpack.c.l.b16 %v1097
      %v1132 = vpack.c.b16 %v1117, %v1116
      %v1133 = vpack.c.b16 %v1119, %v1118
      %v1134 = vpack.c.b16 %v1121, %v1120
      %v1135 = vpack.c.b16 %v1123, %v1122
      %v1136 = vpack.c.b16 %v1125, %v1124
      %v1137 = vpack.c.b16 %v1127, %v1126
      %v1138 = vpack.c.b16 %v1129, %v1128
      %v1139 = vpack.c.b16 %v1131, %v1130
      %1148 = vmatpush.bf16.msra.mxu0 %v1139
      %1149 = vmatpush.bf16.msra.mxu0 %v1138
      %1150 = vmatpush.bf16.msra.mxu0 %v1137
      %1151 = vmatpush.bf16.msra.mxu0 %v1136
      %1152 = vmatpush.bf16.msra.mxu0 %v1135
      %1153 = vmatpush.bf16.msra.mxu0 %v1134
      %1154 = vmatpush.bf16.msra.mxu0 %v1133
      %1155 = vmatpush.bf16.msra.mxu0 %v1132
      %1156 = vmatmul.bf16.gmra.mxu0 %v1098
      %v1157 = vpop.f32.mrf.mxu0
      %v1158 = vadd.f32 0.0, %v1157
      %v1159 = vpop.f32.mrf.mxu0
      %v1160 = vadd.f32 0.0, %v1159
      %1161 = vmatmul.bf16.gmra.mxu0 %v1099
      %v1162 = vpop.f32.mrf.mxu0
      %v1163 = vadd.f32 0.0, %v1162
      %v1164 = vpop.f32.mrf.mxu0
      %1165 = vdwg.mxu0
      %v1166 = vadd.f32 %v890, %v1158
      %v1167 = vadd.f32 %v891, %v1160
      %v1168 = vadd.f32 %v892, %v1163
      %v1169 = vld [vmem:[%s13] sm:$0x1]
      %v1171 = vperm.slane %v1169, 0
      %v1173 = vadd.f32 %v1166, %v1171
      %v1174 = vadd.f32 %v1167, %v1171
      %v1175 = vadd.f32 %v1168, %v1171
      %v1176 = vpack.c.bf16 %v1173, %v1173
      %v1177 = vpack.c.bf16 %v1174, %v1174
      %v1178 = vpack.c.bf16 %v1175, %v1175
      %vm1179 = vcmask 257024
      %1180 = vst.msk [vmem:[%s467] sm:$0xf] %vm1179, %v1176
      %1181 = vst.msk [vmem:[%s467 + $0x4] sm:$0xf] %vm1179, %v1177
      %1182 = vst.msk [vmem:[%s467 + $0x8] sm:$0xf] %vm1179, %v1178
      %p1183 = scmp.lt.s32.totalorder %s25, 1
      %s1184 = scalar_select %p1183, %s25, 1
      %s1185 = smul.addr %s1184, 3
      %s1186 = smul.addr %s1185, 4
      %s1187 = scalar_lea.vmem %s14, %s1186
      // Predicated region
      $region77: #{clip_image_encoder_forward.5} parent=75 // pred_check
        %p1188 = pneg %p342
      $region78: #{clip_image_encoder_forward.5} parent=75 // pred_check_branch
        %1190 = sbr.rel (%p1188) target = $region80
      $region79: #{clip_image_encoder_forward.5} parent=75 // pred_region
        _
      $region80: #{clip_image_encoder_forward.5} parent=75 // pred_fallthru
        _
    $region76: #{clip_image_encoder_forward.5} parent=5 // pred_fallthru
      _
    %p1191 = scmp.le.s32.totalorder 2, %s20
    // Predicated region
    $region81: #{clip_image_encoder_forward.5} parent=5 // pred_check
      %p1192 = pneg %p1191
    $region82: #{clip_image_encoder_forward.5} parent=5 // pred_check_branch
      %1194 = sbr.rel (%p1192) target = $region84
    $region83: #{clip_image_encoder_forward.5} parent=5 // pred_region
      %s1195 = ssub.s32 %s20, 2
      // Predicated region
      $region85: #{clip_image_encoder_forward.5} parent=83 // pred_check
        %p1196 = pneg %p348
      $region86: #{clip_image_encoder_forward.5} parent=83 // pred_check_branch
        %1198 = sbr.rel (%p1196) target = $region88
      $region87: #{clip_image_encoder_forward.5} parent=83 // pred_region
        %p1199 = scmp.lt.s32.totalorder %s26, 1
        %s1200 = scalar_select %p1199, %s26, 1
        %s1201 = smul.addr %s1200, 3
        %s1202 = smul.addr %s1201, 4
        %s1203 = scalar_lea.vmem %s14, %s1202
      $region88: #{clip_image_encoder_forward.5} parent=83 // pred_fallthru
        _
    $region84: #{clip_image_encoder_forward.5} parent=5 // pred_fallthru
      _
  $region6: #{clip_image_encoder_forward.5} parent=0 // loop_footer
    %s24 = sadd.s32 1, %s20
  $region7: #{clip_image_encoder_forward.5} parent=0 // loop_footer_branch
    %19 = sbr.rel target = $region3
  $region8: #{clip_image_encoder_forward.5} parent=0 // loop_exit
    _

</llo_original>
